<compile_context>
chip_gen: v5e
topology: v5e:2x2
jax: 0.10.0
libtpu: 0.0.40
codegen_flags: <defaults>
</compile_context>

<pallas_src>
import numpy as np
import jax
import jax.numpy as jnp
from jax.experimental import pallas as pl
from jax.experimental.pallas import tpu as pltpu

GN_GROUPS = 32
GN_EPS = 1e-5


# ---------------------------------------------------------------------------
# helpers
# ---------------------------------------------------------------------------
def _vmem_limit_bytes():
    """Generation-aware VMEM limit (~48 MiB on v7x, up to 100 MiB on v5e/v6e)."""
    cap = 64 * 1024 * 1024
    try:
        info = pltpu.get_tpu_info()
        cap = int(getattr(info, "vmem_capacity_bytes", cap))
    except Exception:
        pass
    return int(min(max(cap - 16 * 1024 * 1024, 32 * 1024 * 1024),
                   100 * 1024 * 1024))


def _pick_row_tile(h, w, cin, cout, row_tile, vmem_limit):
    """Conv row tile: ~2 MiB f32 accumulator tiles, divides H, keeps (th*W)
    sublane aligned, bounded by a VMEM budget."""
    per_row = w * (cout * 4 + cout * 2 + 9 * cin * 2)   # acc + y + im2col LHS
    if row_tile is not None:
        th = int(max(1, min(h, row_tile)))
    else:
        th = int(max(1, min(h, (2 * 1024 * 1024) // max(1, w * cout * 4))))
    budget = max(per_row, vmem_limit // 4)
    th = int(max(1, min(th, budget // per_row)))
    while th > 1 and (h % th != 0 or (th * w) % 8 != 0):
        th -= 1
    if h % th != 0 or ((th * w) % 8 != 0 and th != h):
        th = h
    return th


def _pick_out_row_tile(h2, w2, cb):
    """Output row tile for the upsample kernel: ~2 MiB f32 blocks."""
    t = int(max(1, min(h2, (2 * 1024 * 1024) // max(1, w2 * cb * 4))))
    while t > 1 and (h2 % t != 0 or (t % 8 != 0 and t != h2)):
        t -= 1
    if h2 % t != 0 or (t % 8 != 0 and t != h2):
        t = h2
    return t


def _bilinear_matrix(size, scale=2):
    """(size*scale, size) interpolation matrix for 2x align_corners=True."""
    out = size * scale
    mat = np.zeros((out, size), np.float32)
    for p in range(out):
        src = p * (size - 1) / (out - 1) if out > 1 else 0.0
        i0 = int(np.floor(src))
        i1 = min(i0 + 1, size - 1)
        w1 = float(src - i0)
        w0 = 1.0 - w1
        mat[p, i0] += w0
        mat[p, i1] += w1
    return jnp.asarray(mat)


def _group_matrices(cout):
    """One-hot channel->group membership matrices (Cout,G) and (G,Cout)."""
    g = np.arange(cout) // (cout // GN_GROUPS)
    gsel = (g[:, None] == np.arange(GN_GROUPS)[None, :]).astype(np.float32)
    return jnp.asarray(gsel), jnp.asarray(gsel.T)


# ---------------------------------------------------------------------------
# kernels
# ---------------------------------------------------------------------------
def _fused_kernel(h, w, cin, cout, upsample):
    """conv3x3 + GroupNorm + ReLU (+ 2x bilinear upsample) per sample."""
    thw = h * w
    cnt = float(thw * (cout // GN_GROUPS))

    def kernel(x_ref, w_ref, gamma_ref, beta_ref, gsel_ref, gselt_ref, *rest):
        if upsample:
            arow_ref, acol_ref, o_ref = rest
        else:
            (o_ref,) = rest
        xwin = x_ref[0]                                   # (h+2, w+2, cin) bf16
        # im2col in VMEM: (thw, 9*cin) LHS -> single MXU matmul, K = 9*Cin.
        taps = []
        for ky in range(3):
            for kx in range(3):
                taps.append(xwin[ky:ky + h, kx:kx + w, :].reshape(thw, cin))
        lhs = jnp.concatenate(taps, axis=-1)              # (thw, 9*cin)
        acc = jnp.dot(lhs, w_ref[...], preferred_element_type=jnp.float32)

        # GroupNorm stats; group pooling / broadcast via one-hot matmuls
        # (the MXU is otherwise idle here).
        s1 = jnp.sum(acc, axis=0, keepdims=True)          # (1, cout)
        s2 = jnp.sum(acc * acc, axis=0, keepdims=True)    # (1, cout)
        g1 = jnp.dot(s1, gsel_ref[...], preferred_element_type=jnp.float32)
        g2 = jnp.dot(s2, gsel_ref[...], preferred_element_type=jnp.float32)
        mean_g = g1 * (1.0 / cnt)
        var_g = jnp.maximum(g2 * (1.0 / cnt) - mean_g * mean_g, 0.0)
        inv_g = jax.lax.rsqrt(var_g + GN_EPS)
        mean_c = jnp.dot(mean_g, gselt_ref[...], preferred_element_type=jnp.float32)
        inv_c = jnp.dot(inv_g, gselt_ref[...], preferred_element_type=jnp.float32)
        scale = inv_c * gamma_ref[...]
        shift = beta_ref[...] - mean_c * scale
        z = jnp.maximum(acc * scale + shift, 0.0)         # (thw, cout)

        if not upsample:
            o_ref[0] = z
            return
        # 2x bilinear upsample via interpolation-matrix matmuls.
        arow = arow_ref[...]                              # (2h, h)
        acol = acol_ref[...]                              # (2w, w)
        t = jnp.dot(arow, z.reshape(h, w * cout),
                    preferred_element_type=jnp.float32)   # (2h, w*cout)
        t3 = t.reshape(2 * h, w, cout)
        for p in range(2 * h):
            o_ref[0, p] = jnp.dot(acol, t3[p],
                                  preferred_element_type=jnp.float32)
    return kernel


def _conv_stats_kernel(h, w, cin, cout, th):
    """Two-pass path kernel 1: conv3x3 + per-tile channel sum / sum-sq."""
    thw = th * w

    def kernel(x_ref, w_ref, y_ref, s_ref):
        j = pl.program_id(1)
        h0 = pl.multiple_of(j * th, th)
        xwin = x_ref[0, pl.ds(h0, th + 2)]                # (th+2, w+2, cin)
        taps = []
        for ky in range(3):
            for kx in range(3):
                taps.append(xwin[ky:ky + th, kx:kx + w, :].reshape(thw, cin))
        lhs = jnp.concatenate(taps, axis=-1)              # (thw, 9*cin)
        acc = jnp.dot(lhs, w_ref[...], preferred_element_type=jnp.float32)
        y_ref[0] = acc.astype(jnp.bfloat16)               # bf16 intermediate
        # stats from the f32 accumulator; two direct stores, no concat.
        s_ref[0, 0, 0:1, :] = jnp.sum(acc, axis=0, keepdims=True)
        s_ref[0, 0, 1:2, :] = jnp.sum(acc * acc, axis=0, keepdims=True)
    return kernel


def _norm_relu_kernel(y_ref, sc_ref, sh_ref, o_ref):
    o_ref[0] = jnp.maximum(
        y_ref[0].astype(jnp.float32) * sc_ref[0] + sh_ref[0], 0.0)


def _norm_relu_up_kernel(h, w, cb, t2h):
    """Two-pass path kernel 2 with fused matmul-based 2x bilinear upsample."""
    def kernel(y_ref, sc_ref, sh_ref, arow_ref, acol_ref, o_ref, z_scr):
        @pl.when(pl.program_id(2) == 0)
        def _():
            z = jnp.maximum(
                y_ref[0].astype(jnp.float32) * sc_ref[0] + sh_ref[0], 0.0)
            z_scr[...] = z.reshape(h, w * cb)
        acol = acol_ref[...]                              # (2w, w)
        t = jnp.dot(arow_ref[...], z_scr[...],
                    preferred_element_type=jnp.float32)   # (t2h, w*cb)
        t3 = t.reshape(t2h, w, cb)
        for p in range(t2h):
            o_ref[0, p] = jnp.dot(acol, t3[p],
                                  preferred_element_type=jnp.float32)
    return kernel


# ---------------------------------------------------------------------------
# main op
# ---------------------------------------------------------------------------
def conv3x3_gn_relu(x_nchw, weight_oihw, gamma, beta, upsample=False,
                    row_tile=None, force_two_pass=False):
    n, cin, h, w = x_nchw.shape
    cout = weight_oihw.shape[0]
    assert cout % GN_GROUPS == 0, "GroupNorm(32) requires Cout % 32 == 0"
    assert cout % 128 == 0 or cout <= 128, "Cout must be <=128 or a multiple of 128"
    if upsample:
        assert h > 1 and w > 1, "align_corners upsample needs H > 1 and W > 1"
    cg = cout // GN_GROUPS
    vmem_limit = _vmem_limit_bytes()

    # One NCHW->NHWC transpose of the (small) input, bf16 for the MXU.
    x_nhwc = jnp.transpose(x_nchw, (0, 2, 3, 1))
    x_pad = jnp.pad(x_nhwc, ((0, 0), (1, 1), (1, 1), (0, 0))).astype(jnp.bfloat16)
    # Fold the nine 3x3 taps into the contraction dim: (9*Cin, Cout).
    w2 = jnp.transpose(weight_oihw, (2, 3, 1, 0)).reshape(9 * cin, cout
                                                          ).astype(jnp.bfloat16)
    gamma2 = gamma.astype(jnp.float32).reshape(1, cout)
    beta2 = beta.astype(jnp.float32).reshape(1, cout)
    if upsample:
        arow = _bilinear_matrix(h)                        # (2h, h)
        acol = _bilinear_matrix(w)                        # (2w, w)

    # ---------------- fully fused single-pass path ----------------
    fused_bytes = ((h + 2) * (w + 2) * cin * 2 * 2
                   + h * w * 9 * cin * 2
                   + 2 * h * w * cout * 4
                   + (2 * h * w * cout * 4 if upsample else 0)
                   + (4 * h * w * cout * 4 if upsample else h * w * cout * 4) * 2
                   + 4 * 1024 * 1024)
    use_fused = ((not force_two_pass) and fused_bytes <= vmem_limit // 2
                 and (not upsample or 2 * h <= 256))

    if use_fused:
        gsel, gselt = _group_matrices(cout)
        kern = _fused_kernel(h, w, cin, cout, upsample)
        in_specs = [
            pl.BlockSpec((1, h + 2, w + 2, cin), lambda i: (i, 0, 0, 0)),
            pl.BlockSpec((9 * cin, cout), lambda i: (0, 0)),
            pl.BlockSpec((1, cout), lambda i: (0, 0)),
            pl.BlockSpec((1, cout), lambda i: (0, 0)),
            pl.BlockSpec((cout, GN_GROUPS), lambda i: (0, 0)),
            pl.BlockSpec((GN_GROUPS, cout), lambda i: (0, 0)),
        ]
        args = [x_pad, w2, gamma2, beta2, gsel, gselt]
        if upsample:
            in_specs += [pl.BlockSpec((2 * h, h), lambda i: (0, 0)),
                         pl.BlockSpec((2 * w, w), lambda i: (0, 0))]
            args += [arow, acol]
            out_shape = jax.ShapeDtypeStruct((n, 2 * h, 2 * w, cout), jnp.float32)
            out_spec = pl.BlockSpec((1, 2 * h, 2 * w, cout),
                                    lambda i: (i, 0, 0, 0))
            out_elems = n * 4 * h * w * cout
        else:
            out_shape = jax.ShapeDtypeStruct((n, h * w, cout), jnp.float32)
            out_spec = pl.BlockSpec((1, h * w, cout), lambda i: (i, 0, 0))
            out_elems = n * h * w * cout
        out = pl.pallas_call(
            kern, out_shape=out_shape, grid=(n,),
            in_specs=in_specs, out_specs=out_spec,
            compiler_params=pltpu.CompilerParams(
                dimension_semantics=("parallel",),
                vmem_limit_bytes=vmem_limit),
            cost_estimate=pl.CostEstimate(
                flops=2 * n * h * w * 9 * cin * cout, transcendentals=0,
                bytes_accessed=x_pad.size * 2 + w2.size * 2 + out_elems * 4),
        )(*args)
        if upsample:
            # TODO(synk): when 2W >= 128, emit NCHW directly from the kernel to
            # skip this extra HBM transpose of the largest tensor.
            return jnp.transpose(out, (0, 3, 1, 2))
        return jnp.transpose(out.reshape(n, h, w, cout), (0, 3, 1, 2))

    # ---------------- two-pass fallback ----------------
    # TODO(synk): for very large H*W on v7x (64 MiB VMEM), stream (th+2)-row
    # halo windows of the padded input via manual make_async_copy instead of
    # pinning the whole padded sample per grid step.
    th = _pick_row_tile(h, w, cin, cout, row_tile, vmem_limit)
    nt = h // th
    thw = th * w

    y, stats = pl.pallas_call(
        _conv_stats_kernel(h, w, cin, cout, th),
        out_shape=(jax.ShapeDtypeStruct((n, h * w, cout), jnp.bfloat16),
                   jax.ShapeDtypeStruct((n, nt, 2, cout), jnp.float32)),
        grid=(n, nt),
        in_specs=[
            pl.BlockSpec((1, h + 2, w + 2, cin), lambda i, j: (i, 0, 0, 0)),
            pl.BlockSpec((9 * cin, cout), lambda i, j: (0, 0)),
        ],
        out_specs=(
            pl.BlockSpec((1, thw, cout), lambda i, j: (i, j, 0)),
            pl.BlockSpec((1, 1, 2, cout), lambda i, j: (i, j, 0, 0)),
        ),
        compiler_params=pltpu.CompilerParams(
            dimension_semantics=("parallel", "parallel"),
            vmem_limit_bytes=vmem_limit),
        cost_estimate=pl.CostEstimate(
            flops=2 * n * h * w * 9 * cin * cout, transcendentals=0,
            bytes_accessed=(x_pad.size * 2 + w2.size * 2
                            + n * h * w * cout * 2 + n * nt * 2 * cout * 4)),
    )(x_pad, w2)

    # Tiny GN statistics reduction + fold affine into per-channel scale/shift.
    s = stats.sum(axis=1)                                   # (N, 2, Cout)
    g1 = s[:, 0, :].reshape(n, GN_GROUPS, cg).sum(-1)       # (N, G)
    g2 = s[:, 1, :].reshape(n, GN_GROUPS, cg).sum(-1)       # (N, G)
    cnt = float(h * w * cg)
    mean = g1 / cnt
    var = jnp.maximum(g2 / cnt - mean * mean, 0.0)
    inv = jax.lax.rsqrt(var + GN_EPS)
    mean_c = jnp.repeat(mean, cg, axis=1)                   # (N, Cout)
    inv_c = jnp.repeat(inv, cg, axis=1)                     # (N, Cout)
    scale = (inv_c * gamma[None, :]).astype(jnp.float32).reshape(n, 1, cout)
    shift = (beta[None, :] - mean_c * inv_c * gamma[None, :]
             ).astype(jnp.float32).reshape(n, 1, cout)

    if not upsample:
        out = pl.pallas_call(
            _norm_relu_kernel,
            out_shape=jax.ShapeDtypeStruct((n, h * w, cout), jnp.float32),
            grid=(n, nt),
            in_specs=[
                pl.BlockSpec((1, thw, cout), lambda i, j: (i, j, 0)),
                pl.BlockSpec((1, 1, cout), lambda i, j: (i, 0, 0)),
                pl.BlockSpec((1, 1, cout), lambda i, j: (i, 0, 0)),
            ],
            out_specs=pl.BlockSpec((1, thw, cout), lambda i, j: (i, j, 0)),
            compiler_params=pltpu.CompilerParams(
                dimension_semantics=("parallel", "parallel"),
                vmem_limit_bytes=vmem_limit),
        )(y, scale, shift)
        return jnp.transpose(out.reshape(n, h, w, cout), (0, 3, 1, 2))

    cb = 128 if cout % 128 == 0 else cout                   # lane-dense blocks
    ncb = cout // cb
    t2h = _pick_out_row_tile(2 * h, 2 * w, cb)
    nrt = (2 * h) // t2h
    out = pl.pallas_call(
        _norm_relu_up_kernel(h, w, cb, t2h),
        out_shape=jax.ShapeDtypeStruct((n, 2 * h, 2 * w, cout), jnp.float32),
        grid=(n, ncb, nrt),
        in_specs=[
            pl.BlockSpec((1, h * w, cb), lambda i, c, r: (i, 0, c)),
            pl.BlockSpec((1, 1, cb), lambda i, c, r: (i, 0, c)),
            pl.BlockSpec((1, 1, cb), lambda i, c, r: (i, 0, c)),
            pl.BlockSpec((t2h, h), lambda i, c, r: (r, 0)),
            pl.BlockSpec((2 * w, w), lambda i, c, r: (0, 0)),
        ],
        out_specs=pl.BlockSpec((1, t2h, 2 * w, cb), lambda i, c, r: (i, r, 0, c)),
        scratch_shapes=[pltpu.VMEM((h, w * cb), jnp.float32)],
        compiler_params=pltpu.CompilerParams(
            dimension_semantics=("parallel", "parallel", "arbitrary"),
            vmem_limit_bytes=vmem_limit),
    )(y, scale, shift, arow, acol)
    # TODO(synk): when 2W >= 128, emit NCHW directly to skip this transpose.
    return jnp.transpose(out, (0, 3, 1, 2))


# ---------------------------------------------------------------------------
# Pure-JAX reference (for sanity check)
# ---------------------------------------------------------------------------
def _reference(x_nchw, weight_oihw, gamma, beta, upsample):
    n, cin, h, w = x_nchw.shape
    cout = weight_oihw.shape[0]
    y = jax.lax.conv_general_dilated(
        x_nchw, weight_oihw, (1, 1), "SAME",
        dimension_numbers=("NCHW", "OIHW", "NCHW"))
    yr = y.reshape(n, GN_GROUPS, cout // GN_GROUPS, h, w)
    mean = yr.mean(axis=(2, 3, 4), keepdims=True)
    var = ((yr - mean) ** 2).mean(axis=(2, 3, 4), keepdims=True)
    yn = ((yr - mean) / jnp.sqrt(var + GN_EPS)).reshape(n, cout, h, w)
    yn = yn * gamma[None, :, None, None] + beta[None, :, None, None]
    yn = jnp.maximum(yn, 0.0)
    if upsample:
        a = _bilinear_matrix(h)
        b = _bilinear_matrix(w)
        yn = jnp.einsum("ph,nchw,qw->ncpq", a, yn, b)
    return yn


if __name__ == "__main__":
    N, CIN, COUT, H, W = 2, 32, 128, 16, 16
    key = jax.random.PRNGKey(0)
    kx, kw, kg, kb = jax.random.split(key, 4)

    x = jax.random.normal(kx, (N, CIN, H, W), jnp.float32)
    weight = jax.random.normal(kw, (COUT, CIN, 3, 3), jnp.float32) * 0.1
    gamma = 1.0 + 0.1 * jax.random.normal(kg, (COUT,), jnp.float32)
    beta = 0.05 * jax.random.normal(kb, (COUT,), jnp.float32)

    for upsample in (False, True):
        ref = _reference(x, weight, gamma, beta, upsample)
        expected = (N, COUT, 2 * H, 2 * W) if upsample else (N, COUT, H, W)
        for force_two_pass in (False, True):     # exercise both code paths
            out = conv3x3_gn_relu(x, weight, gamma, beta, upsample=upsample,
                                  force_two_pass=force_two_pass)
            out = jax.block_until_ready(out)
            assert out.shape == expected, (out.shape, expected)
            max_err = float(jnp.max(jnp.abs(out - ref)))
            assert max_err < 5e-2, (upsample, force_two_pass, max_err)

    print("KERNEL_OK")
</pallas_src>

<mosaic_0001>
module attributes {stable_mosaic.version = 11 : i64} {
  func.func @kernel(%arg0: i32, %arg1: memref<1x18x18x32xbf16, #tpu.memory_space<vmem>>, %arg2: memref<288x128xbf16, #tpu.memory_space<vmem>>, %arg3: memref<1x128xf32, #tpu.memory_space<vmem>>, %arg4: memref<1x128xf32, #tpu.memory_space<vmem>>, %arg5: memref<128x32xf32, #tpu.memory_space<vmem>>, %arg6: memref<32x128xf32, #tpu.memory_space<vmem>>, %arg7: memref<1x256x128xf32, #tpu.memory_space<vmem>>) attributes {dimension_semantics = [#tpu.dimension_semantics<parallel>], iteration_bounds = array<i64: 2>, scalar_prefetch = 0 : i64, scratch_operands = 0 : i64, tpu.core_type = #tpu.core_type<tc>, window_params = [{transform_indices = @transform_0, window_bounds = array<i64: 1, 18, 18, 32>}, {pipeline_mode = #tpu.pipeline_mode<synchronous>, transform_indices = @transform_1, window_bounds = array<i64: 288, 128>}, {pipeline_mode = #tpu.pipeline_mode<synchronous>, transform_indices = @transform_2, window_bounds = array<i64: 1, 128>}, {pipeline_mode = #tpu.pipeline_mode<synchronous>, transform_indices = @transform_3, window_bounds = array<i64: 1, 128>}, {pipeline_mode = #tpu.pipeline_mode<synchronous>, transform_indices = @transform_4, window_bounds = array<i64: 128, 32>}, {pipeline_mode = #tpu.pipeline_mode<synchronous>, transform_indices = @transform_5, window_bounds = array<i64: 32, 128>}, {transform_indices = @transform_6, window_bounds = array<i64: 1, 256, 128>}]} {
    %c0 = arith.constant 0 : index
    %c0_0 = arith.constant 0 : index
    %c0_1 = arith.constant 0 : index
    %c0_2 = arith.constant 0 : index
    %0 = vector.load %arg1[%c0, %c0_0, %c0_1, %c0_2] : memref<1x18x18x32xbf16, #tpu.memory_space<vmem>>, vector<1x18x18x32xbf16>
    %1 = vector.shape_cast %0 : vector<1x18x18x32xbf16> to vector<18x18x32xbf16>
    %2 = vector.extract_strided_slice %1 {offsets = [0, 0, 0], sizes = [16, 16, 32], strides = [1, 1, 1]} : vector<18x18x32xbf16> to vector<16x16x32xbf16>
    %3 = vector.shape_cast %2 : vector<16x16x32xbf16> to vector<256x32xbf16>
    %4 = vector.extract_strided_slice %1 {offsets = [0, 1, 0], sizes = [16, 16, 32], strides = [1, 1, 1]} : vector<18x18x32xbf16> to vector<16x16x32xbf16>
    %5 = vector.shape_cast %4 : vector<16x16x32xbf16> to vector<256x32xbf16>
    %6 = vector.extract_strided_slice %1 {offsets = [0, 2, 0], sizes = [16, 16, 32], strides = [1, 1, 1]} : vector<18x18x32xbf16> to vector<16x16x32xbf16>
    %7 = vector.shape_cast %6 : vector<16x16x32xbf16> to vector<256x32xbf16>
    %8 = vector.extract_strided_slice %1 {offsets = [1, 0, 0], sizes = [16, 16, 32], strides = [1, 1, 1]} : vector<18x18x32xbf16> to vector<16x16x32xbf16>
    %9 = vector.shape_cast %8 : vector<16x16x32xbf16> to vector<256x32xbf16>
    %10 = vector.extract_strided_slice %1 {offsets = [1, 1, 0], sizes = [16, 16, 32], strides = [1, 1, 1]} : vector<18x18x32xbf16> to vector<16x16x32xbf16>
    %11 = vector.shape_cast %10 : vector<16x16x32xbf16> to vector<256x32xbf16>
    %12 = vector.extract_strided_slice %1 {offsets = [1, 2, 0], sizes = [16, 16, 32], strides = [1, 1, 1]} : vector<18x18x32xbf16> to vector<16x16x32xbf16>
    %13 = vector.shape_cast %12 : vector<16x16x32xbf16> to vector<256x32xbf16>
    %14 = vector.extract_strided_slice %1 {offsets = [2, 0, 0], sizes = [16, 16, 32], strides = [1, 1, 1]} : vector<18x18x32xbf16> to vector<16x16x32xbf16>
    %15 = vector.shape_cast %14 : vector<16x16x32xbf16> to vector<256x32xbf16>
    %16 = vector.extract_strided_slice %1 {offsets = [2, 1, 0], sizes = [16, 16, 32], strides = [1, 1, 1]} : vector<18x18x32xbf16> to vector<16x16x32xbf16>
    %17 = vector.shape_cast %16 : vector<16x16x32xbf16> to vector<256x32xbf16>
    %18 = vector.extract_strided_slice %1 {offsets = [2, 2, 0], sizes = [16, 16, 32], strides = [1, 1, 1]} : vector<18x18x32xbf16> to vector<16x16x32xbf16>
    %19 = vector.shape_cast %18 : vector<16x16x32xbf16> to vector<256x32xbf16>
    %20 = tpu.concatenate %3, %5, %7, %9, %11, %13, %15, %17, %19 in 1 : vector<256x32xbf16>, vector<256x32xbf16>, vector<256x32xbf16>, vector<256x32xbf16>, vector<256x32xbf16>, vector<256x32xbf16>, vector<256x32xbf16>, vector<256x32xbf16>, vector<256x32xbf16> -> vector<256x288xbf16>
    %c0_3 = arith.constant 0 : index
    %c0_4 = arith.constant 0 : index
    %21 = vector.load %arg2[%c0_3, %c0_4] : memref<288x128xbf16, #tpu.memory_space<vmem>>, vector<288x128xbf16>
    %cst = arith.constant dense<0.000000e+00> : vector<256x128xf32>
    %22 = tpu.matmul %20, %21, %cst {dimension_numbers = #tpu.dot_dimension_numbers<[1], [0], [0], [1], [0, 0, 1, 1], [], []>} : vector<256x288xbf16>, vector<288x128xbf16>, vector<256x128xf32> -> vector<256x128xf32>
    %cst_5 = arith.constant dense<0.000000e+00> : vector<128xf32>
    %23 = vector.multi_reduction <add>, %22, %cst_5 [0] : vector<256x128xf32> to vector<128xf32>
    %24 = vector.shape_cast %23 : vector<128xf32> to vector<1x128xf32>
    %25 = arith.mulf %22, %22 : vector<256x128xf32>
    %cst_6 = arith.constant dense<0.000000e+00> : vector<128xf32>
    %26 = vector.multi_reduction <add>, %25, %cst_6 [0] : vector<256x128xf32> to vector<128xf32>
    %27 = vector.shape_cast %26 : vector<128xf32> to vector<1x128xf32>
    %c0_7 = arith.constant 0 : index
    %c0_8 = arith.constant 0 : index
    %28 = vector.load %arg5[%c0_7, %c0_8] : memref<128x32xf32, #tpu.memory_space<vmem>>, vector<128x32xf32>
    %cst_9 = arith.constant dense<0.000000e+00> : vector<1x32xf32>
    %29 = tpu.matmul %24, %28, %cst_9 {dimension_numbers = #tpu.dot_dimension_numbers<[1], [0], [0], [1], [0, 0, 1, 1], [], []>} : vector<1x128xf32>, vector<128x32xf32>, vector<1x32xf32> -> vector<1x32xf32>
    %c0_10 = arith.constant 0 : index
    %c0_11 = arith.constant 0 : index
    %30 = vector.load %arg5[%c0_10, %c0_11] : memref<128x32xf32, #tpu.memory_space<vmem>>, vector<128x32xf32>
    %cst_12 = arith.constant dense<0.000000e+00> : vector<1x32xf32>
    %31 = tpu.matmul %27, %30, %cst_12 {dimension_numbers = #tpu.dot_dimension_numbers<[1], [0], [0], [1], [0, 0, 1, 1], [], []>} : vector<1x128xf32>, vector<128x32xf32>, vector<1x32xf32> -> vector<1x32xf32>
    %cst_13 = arith.constant 9.765625E-4 : f32
    %32 = vector.broadcast %cst_13 : f32 to vector<1x32xf32>
    %33 = arith.mulf %29, %32 : vector<1x32xf32>
    %cst_14 = arith.constant 9.765625E-4 : f32
    %34 = vector.broadcast %cst_14 : f32 to vector<1x32xf32>
    %35 = arith.mulf %31, %34 : vector<1x32xf32>
    %36 = arith.mulf %33, %33 : vector<1x32xf32>
    %37 = arith.subf %35, %36 : vector<1x32xf32>
    %cst_15 = arith.constant 0.000000e+00 : f32
    %38 = vector.broadcast %cst_15 : f32 to vector<1x32xf32>
    %39 = arith.maximumf %37, %38 : vector<1x32xf32>
    %cst_16 = arith.constant 9.99999974E-6 : f32
    %40 = vector.broadcast %cst_16 : f32 to vector<1x32xf32>
    %41 = arith.addf %39, %40 : vector<1x32xf32>
    %42 = math.rsqrt %41 : vector<1x32xf32>
    %c0_17 = arith.constant 0 : index
    %c0_18 = arith.constant 0 : index
    %43 = vector.load %arg6[%c0_17, %c0_18] : memref<32x128xf32, #tpu.memory_space<vmem>>, vector<32x128xf32>
    %cst_19 = arith.constant dense<0.000000e+00> : vector<1x128xf32>
    %44 = tpu.matmul %33, %43, %cst_19 {dimension_numbers = #tpu.dot_dimension_numbers<[1], [0], [0], [1], [0, 0, 1, 1], [], []>} : vector<1x32xf32>, vector<32x128xf32>, vector<1x128xf32> -> vector<1x128xf32>
    %c0_20 = arith.constant 0 : index
    %c0_21 = arith.constant 0 : index
    %45 = vector.load %arg6[%c0_20, %c0_21] : memref<32x128xf32, #tpu.memory_space<vmem>>, vector<32x128xf32>
    %cst_22 = arith.constant dense<0.000000e+00> : vector<1x128xf32>
    %46 = tpu.matmul %42, %45, %cst_22 {dimension_numbers = #tpu.dot_dimension_numbers<[1], [0], [0], [1], [0, 0, 1, 1], [], []>} : vector<1x32xf32>, vector<32x128xf32>, vector<1x128xf32> -> vector<1x128xf32>
    %c0_23 = arith.constant 0 : index
    %c0_24 = arith.constant 0 : index
    %47 = vector.load %arg3[%c0_23, %c0_24] : memref<1x128xf32, #tpu.memory_space<vmem>>, vector<1x128xf32>
    %48 = arith.mulf %46, %47 : vector<1x128xf32>
    %c0_25 = arith.constant 0 : index
    %c0_26 = arith.constant 0 : index
    %49 = vector.load %arg4[%c0_25, %c0_26] : memref<1x128xf32, #tpu.memory_space<vmem>>, vector<1x128xf32>
    %50 = arith.mulf %44, %48 : vector<1x128xf32>
    %51 = arith.subf %49, %50 : vector<1x128xf32>
    %52 = vector.broadcast %48 : vector<1x128xf32> to vector<256x128xf32>
    %53 = arith.mulf %22, %52 : vector<256x128xf32>
    %54 = vector.broadcast %51 : vector<1x128xf32> to vector<256x128xf32>
    %55 = arith.addf %53, %54 : vector<256x128xf32>
    %cst_27 = arith.constant 0.000000e+00 : f32
    %56 = vector.broadcast %cst_27 : f32 to vector<256x128xf32>
    %57 = arith.maximumf %55, %56 : vector<256x128xf32>
    %c0_28 = arith.constant 0 : index
    %c0_29 = arith.constant 0 : index
    %c0_30 = arith.constant 0 : index
    %58 = vector.load %arg7[%c0_28, %c0_29, %c0_30] : memref<1x256x128xf32, #tpu.memory_space<vmem>>, vector<1x256x128xf32>
    %59 = vector.shape_cast %58 : vector<1x256x128xf32> to vector<256x128xf32>
    %60 = vector.shape_cast %57 : vector<256x128xf32> to vector<1x256x128xf32>
    tpu.vector_store %arg7[%c0_28, %c0_29, %c0_30], %60 {strides = array<i32>} : memref<1x256x128xf32, #tpu.memory_space<vmem>>, vector<1x256x128xf32>,
    return
  }
  func.func @transform_0(%arg0: i32) -> (i32, i32, i32, i32) {
    %c0_i32 = arith.constant 0 : i32
    %c0_i32_0 = arith.constant 0 : i32
    %c0_i32_1 = arith.constant 0 : i32
    %c0_i32_2 = arith.constant 0 : i32
    return %arg0, %c0_i32, %c0_i32_0, %c0_i32_1 : i32, i32, i32, i32
  }
  func.func @transform_1(%arg0: i32) -> (i32, i32) {
    %c0_i32 = arith.constant 0 : i32
    %c0_i32_0 = arith.constant 0 : i32
    %c0_i32_1 = arith.constant 0 : i32
    return %c0_i32, %c0_i32_0 : i32, i32
  }
  func.func @transform_2(%arg0: i32) -> (i32, i32) {
    %c0_i32 = arith.constant 0 : i32
    %c0_i32_0 = arith.constant 0 : i32
    %c0_i32_1 = arith.constant 0 : i32
    return %c0_i32, %c0_i32_0 : i32, i32
  }
  func.func @transform_3(%arg0: i32) -> (i32, i32) {
    %c0_i32 = arith.constant 0 : i32
    %c0_i32_0 = arith.constant 0 : i32
    %c0_i32_1 = arith.constant 0 : i32
    return %c0_i32, %c0_i32_0 : i32, i32
  }
  func.func @transform_4(%arg0: i32) -> (i32, i32) {
    %c0_i32 = arith.constant 0 : i32
    %c0_i32_0 = arith.constant 0 : i32
    %c0_i32_1 = arith.constant 0 : i32
    return %c0_i32, %c0_i32_0 : i32, i32
  }
  func.func @transform_5(%arg0: i32) -> (i32, i32) {
    %c0_i32 = arith.constant 0 : i32
    %c0_i32_0 = arith.constant 0 : i32
    %c0_i32_1 = arith.constant 0 : i32
    return %c0_i32, %c0_i32_0 : i32, i32
  }
  func.func @transform_6(%arg0: i32) -> (i32, i32, i32) {
    %c0_i32 = arith.constant 0 : i32
    %c0_i32_0 = arith.constant 0 : i32
    %c0_i32_1 = arith.constant 0 : i32
    return %arg0, %c0_i32, %c0_i32_0 : i32, i32, i32
  }
}

</mosaic_0001>

<llo_original>
// kernel: tpu_custom_call.1
$region0: #{tpu_custom_call.1}
  #allocation0 [shape = 'u32[]', space=smem, size = 0x4, offset = 0x4, fixed_abs, tag = 'smem constant byte address 0x4 - core index']
  #allocation1 [shape = 'u32[72,128]{1,0:T(1,128)}', space=vmem, size = 0x9000, scoped, tag = 'internal scratch']
  %s0 = inlined_call_operand.vmem [shape: bf16[2,18,18,32], index: 0, kind: input, shape index: {}]
  %s1 = inlined_call_operand.vmem [shape: bf16[288,128], index: 1, kind: input, shape index: {}]
  %s2 = inlined_call_operand.vmem [shape: f32[1,128], index: 2, kind: input, shape index: {}]
  %s3 = inlined_call_operand.vmem [shape: f32[1,128], index: 3, kind: input, shape index: {}]
  %s4 = inlined_call_operand.vmem [shape: f32[128,32], index: 4, kind: input, shape index: {}]
  %s5 = inlined_call_operand.vmem [shape: f32[32,128], index: 5, kind: input, shape index: {}]
  %s6 = inlined_call_operand.hbm [shape: f32[2,256,128], index: 6, kind: output, shape index: {}]
  %s7 = sld [smem:[#allocation0]]
  $region57: #{tpu_custom_call.1} parent=0
    _
  %s9 = ssub.s32 1, %s7
  %s10 = scalar_select 0, %s9, %s7
  $region1: #{tpu_custom_call.1} parent=0
    #allocation2 [shape = 'u8[262144]{0}', space=vmem, size = 0x40000, scoped, tag = 'output window, operand 0']
    #allocation3 [shape = 's32[2]{0}', space=sflag, size = 0x8, scoped, tag = 'scoped memory for tpu_custom_call.1']
    %11 = vsyncpa [#allocation3], 0
    %s12 = scalar_lea.sflag [#allocation3], 1
    %13 = vsyncpa %s12, 0
    loop: start=0, step=1, limit=4
    $region2: #{tpu_custom_call.1} parent=1 // loop_pre_header
      _
    $region3: #{tpu_custom_call.1} parent=1 // loop_header
      %s15 = sphi 0, %s19
      %p16 = scmp.ge.s32.totalorder %s15, 4
      %s25 = sphi 0, %s27
      %s28 = sphi 0, %s25
      %s29 = sphi 0, %s28
      %s45 = sphi 0, %s29
      %s49 = sphi 0, %s49
      %s51 = sphi 0, %s49
      %s52 = sphi 0, %s51
      %s66 = sphi 0, %s52
      %s70 = sphi 0, %s70
      %s72 = sphi 0, %s70
      %s73 = sphi 0, %s72
      %s87 = sphi 0, %s73
      %s91 = sphi 0, %s91
      %s93 = sphi 0, %s91
      %s94 = sphi 0, %s93
      %s108 = sphi 0, %s94
      %s112 = sphi 0, %s112
      %s114 = sphi 0, %s112
      %s115 = sphi 0, %s114
      %s129 = sphi 0, %s115
      %s133 = sphi 0, %s133
      %s135 = sphi 0, %s133
      %s136 = sphi 0, %s135
      %s150 = sphi 0, %s136
      %s156 = sphi 0, %s158
      %s159 = sphi 0, %s156
      %s160 = sphi 0, %s159
      %s176 = sphi 0, %s160
    $region4: #{tpu_custom_call.1} parent=1 // loop_header_branch
      %18 = sbr.rel (%p16) target = $region8
    $region5: #{tpu_custom_call.1} parent=1 // loop_body
      %s20 = ssub.s32 %s15, 1
      %s21 = ssub.s32 %s15, 2
      %s22 = sadd.s32 %s15, 1
      %s23 = ssub.s32 %s15, %s22
      %p24 = scmp.eq.s32.totalorder %s23, 0
      %s26 = sadd.s32 %s25, 1
      %s27 = scalar_select %p24, %s25, %s26
      %p30 = pneg %p24
      %p31 = scmp.eq.s32.totalorder %s15, 1
      %p32 = por %p30, %p31
      %p33 = scmp.ne.s32.totalorder %s25, %s28
      %p34 = scmp.eq.s32.totalorder %s15, 0
      %p35 = por %p33, %p34
      %p36 = scmp.ne.s32.totalorder %s25, %s28
      %p37 = scmp.eq.s32.totalorder %s20, 1
      %p38 = por %p36, %p37
      %p39 = scmp.ne.s32.totalorder %s28, %s29
      %p40 = scmp.eq.s32.totalorder %s20, 0
      %p41 = por %p39, %p40
      %p42 = scmp.ne.s32.totalorder %s28, %s29
      %p43 = scmp.eq.s32.totalorder %s21, 1
      %p44 = por %p42, %p43
      %p46 = scmp.ne.s32.totalorder %s29, %s45
      %p47 = scmp.eq.s32.totalorder %s21, 0
      %p48 = por %p46, %p47
      %s50 = sadd.s32 %s49, 1
      %p53 = scmp.eq.s32.totalorder %s15, 1
      %p54 = scmp.ne.s32.totalorder %s49, %s51
      %p55 = scmp.eq.s32.totalorder %s15, 0
      %p56 = por %p54, %p55
      %p57 = scmp.ne.s32.totalorder %s49, %s51
      %p58 = scmp.eq.s32.totalorder %s20, 1
      %p59 = por %p57, %p58
      %p60 = scmp.ne.s32.totalorder %s51, %s52
      %p61 = scmp.eq.s32.totalorder %s20, 0
      %p62 = por %p60, %p61
      %p63 = scmp.ne.s32.totalorder %s51, %s52
      %p64 = scmp.eq.s32.totalorder %s21, 1
      %p65 = por %p63, %p64
      %p67 = scmp.ne.s32.totalorder %s52, %s66
      %p68 = scmp.eq.s32.totalorder %s21, 0
      %p69 = por %p67, %p68
      %s71 = sadd.s32 %s70, 1
      %p74 = scmp.eq.s32.totalorder %s15, 1
      %p75 = scmp.ne.s32.totalorder %s70, %s72
      %p76 = scmp.eq.s32.totalorder %s15, 0
      %p77 = por %p75, %p76
      %p78 = scmp.ne.s32.totalorder %s70, %s72
      %p79 = scmp.eq.s32.totalorder %s20, 1
      %p80 = por %p78, %p79
      %p81 = scmp.ne.s32.totalorder %s72, %s73
      %p82 = scmp.eq.s32.totalorder %s20, 0
      %p83 = por %p81, %p82
      %p84 = scmp.ne.s32.totalorder %s72, %s73
      %p85 = scmp.eq.s32.totalorder %s21, 1
      %p86 = por %p84, %p85
      %p88 = scmp.ne.s32.totalorder %s73, %s87
      %p89 = scmp.eq.s32.totalorder %s21, 0
      %p90 = por %p88, %p89
      %s92 = sadd.s32 %s91, 1
      %p95 = scmp.eq.s32.totalorder %s15, 1
      %p96 = scmp.ne.s32.totalorder %s91, %s93
      %p97 = scmp.eq.s32.totalorder %s15, 0
      %p98 = por %p96, %p97
      %p99 = scmp.ne.s32.totalorder %s91, %s93
      %p100 = scmp.eq.s32.totalorder %s20, 1
      %p101 = por %p99, %p100
      %p102 = scmp.ne.s32.totalorder %s93, %s94
      %p103 = scmp.eq.s32.totalorder %s20, 0
      %p104 = por %p102, %p103
      %p105 = scmp.ne.s32.totalorder %s93, %s94
      %p106 = scmp.eq.s32.totalorder %s21, 1
      %p107 = por %p105, %p106
      %p109 = scmp.ne.s32.totalorder %s94, %s108
      %p110 = scmp.eq.s32.totalorder %s21, 0
      %p111 = por %p109, %p110
      %s113 = sadd.s32 %s112, 1
      %p116 = scmp.eq.s32.totalorder %s15, 1
      %p117 = scmp.ne.s32.totalorder %s112, %s114
      %p118 = scmp.eq.s32.totalorder %s15, 0
      %p119 = por %p117, %p118
      %p120 = scmp.ne.s32.totalorder %s112, %s114
      %p121 = scmp.eq.s32.totalorder %s20, 1
      %p122 = por %p120, %p121
      %p123 = scmp.ne.s32.totalorder %s114, %s115
      %p124 = scmp.eq.s32.totalorder %s20, 0
      %p125 = por %p123, %p124
      %p126 = scmp.ne.s32.totalorder %s114, %s115
      %p127 = scmp.eq.s32.totalorder %s21, 1
      %p128 = por %p126, %p127
      %p130 = scmp.ne.s32.totalorder %s115, %s129
      %p131 = scmp.eq.s32.totalorder %s21, 0
      %p132 = por %p130, %p131
      %s134 = sadd.s32 %s133, 1
      %p137 = scmp.eq.s32.totalorder %s15, 1
      %p138 = scmp.ne.s32.totalorder %s133, %s135
      %p139 = scmp.eq.s32.totalorder %s15, 0
      %p140 = por %p138, %p139
      %p141 = scmp.ne.s32.totalorder %s133, %s135
      %p142 = scmp.eq.s32.totalorder %s20, 1
      %p143 = por %p141, %p142
      %p144 = scmp.ne.s32.totalorder %s135, %s136
      %p145 = scmp.eq.s32.totalorder %s20, 0
      %p146 = por %p144, %p145
      %p147 = scmp.ne.s32.totalorder %s135, %s136
      %p148 = scmp.eq.s32.totalorder %s21, 1
      %p149 = por %p147, %p148
      %p151 = scmp.ne.s32.totalorder %s136, %s150
      %p152 = scmp.eq.s32.totalorder %s21, 0
      %p153 = por %p151, %p152
      %s154 = ssub.s32 %s15, %s22
      %p155 = scmp.eq.s32.totalorder %s154, 0
      %s157 = sadd.s32 %s156, 1
      %s158 = scalar_select %p155, %s156, %s157
      %p161 = pneg %p155
      %p162 = scmp.eq.s32.totalorder %s15, 1
      %p163 = por %p161, %p162
      %p164 = scmp.ne.s32.totalorder %s156, %s159
      %p165 = scmp.eq.s32.totalorder %s15, 0
      %p166 = por %p164, %p165
      %p167 = scmp.ne.s32.totalorder %s156, %s159
      %p168 = scmp.eq.s32.totalorder %s20, 1
      %p169 = por %p167, %p168
      %p170 = scmp.ne.s32.totalorder %s159, %s160
      %p171 = scmp.eq.s32.totalorder %s20, 0
      %p172 = por %p170, %p171
      %p173 = scmp.ne.s32.totalorder %s159, %s160
      %p174 = scmp.eq.s32.totalorder %s21, 1
      %p175 = por %p173, %p174
      %p177 = scmp.ne.s32.totalorder %s160, %s176
      %p178 = scmp.eq.s32.totalorder %s21, 0
      %p179 = por %p177, %p178
      %p180 = scmp.le.s32.totalorder 1, %s15
      %p181 = scmp.lt.s32.totalorder %s15, 3
      %p182 = pnand %p180, %p181
      %p183 = pneg %p182
      // Predicated region
      $region9: #{tpu_custom_call.1} parent=5 // pred_check
        _
      $region10: #{tpu_custom_call.1} parent=5 // pred_check_branch
        %185 = sbr.rel (%p182) target = $region12
      $region11: #{tpu_custom_call.1} parent=5 // pred_region
        %s186 = ssub.s32 %s15, 1
        // Predicated region
        $region13: #{tpu_custom_call.1} parent=11 // pred_check
          %p187 = pneg %p62
        $region14: #{tpu_custom_call.1} parent=11 // pred_check_branch
          %189 = sbr.rel (%p187) target = $region16
        $region15: #{tpu_custom_call.1} parent=11 // pred_region
          _
        $region16: #{tpu_custom_call.1} parent=11 // pred_fallthru
          _
        // Predicated region
        $region17: #{tpu_custom_call.1} parent=11 // pred_check
          %p190 = pneg %p83
        $region18: #{tpu_custom_call.1} parent=11 // pred_check_branch
          %192 = sbr.rel (%p190) target = $region20
        $region19: #{tpu_custom_call.1} parent=11 // pred_region
          _
        $region20: #{tpu_custom_call.1} parent=11 // pred_fallthru
          _
        // Predicated region
        $region21: #{tpu_custom_call.1} parent=11 // pred_check
          %p193 = pneg %p104
        $region22: #{tpu_custom_call.1} parent=11 // pred_check_branch
          %195 = sbr.rel (%p193) target = $region24
        $region23: #{tpu_custom_call.1} parent=11 // pred_region
          _
        $region24: #{tpu_custom_call.1} parent=11 // pred_fallthru
          _
        // Predicated region
        $region25: #{tpu_custom_call.1} parent=11 // pred_check
          %p196 = pneg %p125
        $region26: #{tpu_custom_call.1} parent=11 // pred_check_branch
          %198 = sbr.rel (%p196) target = $region28
        $region27: #{tpu_custom_call.1} parent=11 // pred_region
          _
        $region28: #{tpu_custom_call.1} parent=11 // pred_fallthru
          _
        // Predicated region
        $region29: #{tpu_custom_call.1} parent=11 // pred_check
          %p199 = pneg %p146
        $region30: #{tpu_custom_call.1} parent=11 // pred_check_branch
          %201 = sbr.rel (%p199) target = $region32
        $region31: #{tpu_custom_call.1} parent=11 // pred_region
          _
        $region32: #{tpu_custom_call.1} parent=11 // pred_fallthru
          _
      $region12: #{tpu_custom_call.1} parent=5 // pred_fallthru
        _
      %p202 = scmp.lt.s32.totalorder %s15, 2
      // Predicated region
      $region33: #{tpu_custom_call.1} parent=5 // pred_check
        %p203 = pneg %p202
      $region34: #{tpu_custom_call.1} parent=5 // pred_check_branch
        %205 = sbr.rel (%p203) target = $region36
      $region35: #{tpu_custom_call.1} parent=5 // pred_region
        // Predicated region
        $region37: #{tpu_custom_call.1} parent=35 // pred_check
          %p206 = pneg %p35
        $region38: #{tpu_custom_call.1} parent=35 // pred_check_branch
          %208 = sbr.rel (%p206) target = $region40
        $region39: #{tpu_custom_call.1} parent=35 // pred_region
          %p209 = scmp.lt.s32.totalorder %s15, 1
          %s210 = scalar_select %p209, %s15, 1
          %s211 = smul.addr %s210, 54
          %s212 = smul.addr %s211, 4
          %s213 = scalar_lea.vmem %s0, %s212
        $region40: #{tpu_custom_call.1} parent=35 // pred_fallthru
          _
      $region36: #{tpu_custom_call.1} parent=5 // pred_fallthru
        _
      %p214 = scmp.le.s32.totalorder 1, %s15
      %p215 = scmp.lt.s32.totalorder %s15, 3
      %p216 = pnand %p214, %p215
      %p217 = pneg %p216
      // Predicated region
      $region41: #{tpu_custom_call.1} parent=5 // pred_check
        _
      $region42: #{tpu_custom_call.1} parent=5 // pred_check_branch
        %219 = sbr.rel (%p216) target = $region44
      $region43: #{tpu_custom_call.1} parent=5 // pred_region
        %s220 = ssub.s32 %s15, 1
        %p221 = scmp.lt.s32.totalorder %s20, 1
        %s222 = scalar_select %p221, %s20, 1
        %s223 = smul.addr %s222, 54
        %s224 = smul.addr %s223, 4
        %s225 = scalar_lea.vmem %s0, %s224
        %p226 = pneg %p41
        %p227 = pneg %p38
        %p228 = pneg %p62
        %p229 = pneg %p59
        %p230 = pneg %p83
        %p231 = pneg %p80
        %p232 = pneg %p104
        %p233 = pneg %p101
        %p234 = pneg %p125
        %p235 = pneg %p122
        %p236 = pneg %p146
        %p237 = pneg %p143
        %p238 = pneg %p172
        %p239 = pneg %p169
        %s240 = sand.u32 %s159, 1
        %s241 = scalar_lea.sflag [#allocation3], %s240
        %s242 = sand.u32 %s159, 1
        %s243 = smul.addr %s242, 256
        %s244 = scalar_lea.vmem [#allocation2], %s243
        %p245 = scmp.lt.s32.totalorder %s20, 1
        %s246 = scalar_select %p245, %s20, 1
        %s247 = smul.addr %s246, 54
        %s248 = smul.addr %s247, 4
        %s249 = scalar_lea.vmem %s0, %s248
        %v251 = vld [vmem:[%s249] sm:$0xf]
        %v252 = vld [vmem:[%s249 + $0x4] sm:$0xf]
        %v253 = vld [vmem:[%s249 + $0x8] sm:$0x1]
        %v254 = vld [vmem:[%s249 + $0xc] sm:$0xf]
        %v255 = vld [vmem:[%s249 + $0x10] sm:$0xf]
        %v256 = vld [vmem:[%s249 + $0x14] sm:$0x1]
        %v257 = vld [vmem:[%s249 + $0x18] sm:$0xf]
        %v258 = vld [vmem:[%s249 + $0x1c] sm:$0xf]
        %v259 = vld [vmem:[%s249 + $0x20] sm:$0x1]
        %v260 = vld [vmem:[%s249 + $0x24] sm:$0xf]
        %v261 = vld [vmem:[%s249 + $0x28] sm:$0xf]
        %v262 = vld [vmem:[%s249 + $0x2c] sm:$0x1]
        %v263 = vld [vmem:[%s249 + $0x30] sm:$0xf]
        %v264 = vld [vmem:[%s249 + $0x34] sm:$0xf]
        %v265 = vld [vmem:[%s249 + $0x38] sm:$0x1]
        %v266 = vld [vmem:[%s249 + $0x3c] sm:$0xf]
        %v267 = vld [vmem:[%s249 + $0x40] sm:$0xf]
        %v268 = vld [vmem:[%s249 + $0x44] sm:$0x1]
        %v269 = vld [vmem:[%s249 + $0x48] sm:$0xf]
        %v270 = vld [vmem:[%s249 + $0x4c] sm:$0xf]
        %v271 = vld [vmem:[%s249 + $0x50] sm:$0x1]
        %v272 = vld [vmem:[%s249 + $0x54] sm:$0xf]
        %v273 = vld [vmem:[%s249 + $0x58] sm:$0xf]
        %v274 = vld [vmem:[%s249 + $0x5c] sm:$0x1]
        %v275 = vld [vmem:[%s249 + $0x60] sm:$0xf]
        %v276 = vld [vmem:[%s249 + $0x64] sm:$0xf]
        %v277 = vld [vmem:[%s249 + $0x68] sm:$0x1]
        %v278 = vld [vmem:[%s249 + $0x6c] sm:$0xf]
        %v279 = vld [vmem:[%s249 + $0x70] sm:$0xf]
        %v280 = vld [vmem:[%s249 + $0x74] sm:$0x1]
        %v281 = vld [vmem:[%s249 + $0x78] sm:$0xf]
        %v282 = vld [vmem:[%s249 + $0x7c] sm:$0xf]
        %v283 = vld [vmem:[%s249 + $0x80] sm:$0x1]
        %v284 = vld [vmem:[%s249 + $0x84] sm:$0xf]
        %v285 = vld [vmem:[%s249 + $0x88] sm:$0xf]
        %v286 = vld [vmem:[%s249 + $0x8c] sm:$0x1]
        %v287 = vld [vmem:[%s249 + $0x90] sm:$0xf]
        %v288 = vld [vmem:[%s249 + $0x94] sm:$0xf]
        %v289 = vld [vmem:[%s249 + $0x98] sm:$0x1]
        %v290 = vld [vmem:[%s249 + $0x9c] sm:$0xf]
        %v291 = vld [vmem:[%s249 + $0xa0] sm:$0xf]
        %v292 = vld [vmem:[%s249 + $0xa4] sm:$0x1]
        %v293 = vld [vmem:[%s249 + $0xa8] sm:$0xf]
        %v294 = vld [vmem:[%s249 + $0xac] sm:$0xf]
        %v295 = vld [vmem:[%s249 + $0xb0] sm:$0x1]
        %v296 = vld [vmem:[%s249 + $0xb4] sm:$0xf]
        %v297 = vld [vmem:[%s249 + $0xb8] sm:$0xf]
        %v298 = vld [vmem:[%s249 + $0xbc] sm:$0x1]
        %v299 = vld [vmem:[%s249 + $0xc0] sm:$0xf]
        %v300 = vld [vmem:[%s249 + $0xc4] sm:$0xf]
        %v301 = vld [vmem:[%s249 + $0xc8] sm:$0x1]
        %v302 = vld [vmem:[%s249 + $0xcc] sm:$0xf]
        %v303 = vld [vmem:[%s249 + $0xd0] sm:$0xf]
        %v304 = vld [vmem:[%s249 + $0xd4] sm:$0x1]
        %vm305 = vsmask.f32 3328
        %vm306 = vsmask.f32 7440
        %vm307 = vmor %vm305, %vm306
        %v309 = vshrl.u32 %v251, 16
        %v311 = vrot.slane %v309, 4
        %v312 = vshll.u32 %v251, 16
        %v314 = vrot.slane %v312, 5
        %v315 = vor.u32 %v311, %v314
        %v316 = vrot.slane %v315, 4
        %v318 = vshll.u32 %v252, 16
        %v320 = vrot.slane %v318, 5
        %v321 = vsel %vm307, %v316, %v320
        %v322 = vshrl.u32 %v252, 16
        %v324 = vrot.slane %v322, 4
        %v325 = vor.u32 %v324, %v320
        %v326 = vrot.slane %v325, 4
        %v328 = vshll.u32 %v253, 16
        %v330 = vrot.slane %v328, 5
        %v331 = vsel %vm307, %v326, %v330
        %v333 = vshrl.u32 %v254, 16
        %v335 = vrot.slane %v333, 4
        %v336 = vshll.u32 %v254, 16
        %v338 = vrot.slane %v336, 5
        %v339 = vor.u32 %v335, %v338
        %v340 = vrot.slane %v339, 4
        %v342 = vshll.u32 %v255, 16
        %v344 = vrot.slane %v342, 5
        %v345 = vsel %vm307, %v340, %v344
        %v346 = vshrl.u32 %v255, 16
        %v348 = vrot.slane %v346, 4
        %v349 = vor.u32 %v348, %v344
        %v350 = vrot.slane %v349, 4
        %v352 = vshll.u32 %v256, 16
        %v354 = vrot.slane %v352, 5
        %v355 = vsel %vm307, %v350, %v354
        %v357 = vshrl.u32 %v257, 16
        %v359 = vrot.slane %v357, 4
        %v360 = vshll.u32 %v257, 16
        %v362 = vrot.slane %v360, 5
        %v363 = vor.u32 %v359, %v362
        %v364 = vrot.slane %v363, 4
        %v366 = vshll.u32 %v258, 16
        %v368 = vrot.slane %v366, 5
        %v369 = vsel %vm307, %v364, %v368
        %v370 = vshrl.u32 %v258, 16
        %v372 = vrot.slane %v370, 4
        %v373 = vor.u32 %v372, %v368
        %v374 = vrot.slane %v373, 4
        %v376 = vshll.u32 %v259, 16
        %v378 = vrot.slane %v376, 5
        %v379 = vsel %vm307, %v374, %v378
        %v381 = vshrl.u32 %v260, 16
        %v383 = vrot.slane %v381, 4
        %v384 = vshll.u32 %v260, 16
        %v386 = vrot.slane %v384, 5
        %v387 = vor.u32 %v383, %v386
        %v388 = vrot.slane %v387, 4
        %v390 = vshll.u32 %v261, 16
        %v392 = vrot.slane %v390, 5
        %v393 = vsel %vm307, %v388, %v392
        %v394 = vshrl.u32 %v261, 16
        %v396 = vrot.slane %v394, 4
        %v397 = vor.u32 %v396, %v392
        %v398 = vrot.slane %v397, 4
        %v400 = vshll.u32 %v262, 16
        %v402 = vrot.slane %v400, 5
        %v403 = vsel %vm307, %v398, %v402
        %v405 = vshrl.u32 %v263, 16
        %v407 = vrot.slane %v405, 4
        %v408 = vshll.u32 %v263, 16
        %v410 = vrot.slane %v408, 5
        %v411 = vor.u32 %v407, %v410
        %v412 = vrot.slane %v411, 4
        %v414 = vshll.u32 %v264, 16
        %v416 = vrot.slane %v414, 5
        %v417 = vsel %vm307, %v412, %v416
        %v418 = vshrl.u32 %v264, 16
        %v420 = vrot.slane %v418, 4
        %v421 = vor.u32 %v420, %v416
        %v422 = vrot.slane %v421, 4
        %v424 = vshll.u32 %v265, 16
        %v426 = vrot.slane %v424, 5
        %v427 = vsel %vm307, %v422, %v426
        %v429 = vshrl.u32 %v266, 16
        %v431 = vrot.slane %v429, 4
        %v432 = vshll.u32 %v266, 16
        %v434 = vrot.slane %v432, 5
        %v435 = vor.u32 %v431, %v434
        %v436 = vrot.slane %v435, 4
        %v438 = vshll.u32 %v267, 16
        %v440 = vrot.slane %v438, 5
        %v441 = vsel %vm307, %v436, %v440
        %v442 = vshrl.u32 %v267, 16
        %v444 = vrot.slane %v442, 4
        %v445 = vor.u32 %v444, %v440
        %v446 = vrot.slane %v445, 4
        %v448 = vshll.u32 %v268, 16
        %v450 = vrot.slane %v448, 5
        %v451 = vsel %vm307, %v446, %v450
        %v453 = vshrl.u32 %v269, 16
        %v455 = vrot.slane %v453, 4
        %v456 = vshll.u32 %v269, 16
        %v458 = vrot.slane %v456, 5
        %v459 = vor.u32 %v455, %v458
        %v460 = vrot.slane %v459, 4
        %v462 = vshll.u32 %v270, 16
        %v464 = vrot.slane %v462, 5
        %v465 = vsel %vm307, %v460, %v464
        %v466 = vshrl.u32 %v270, 16
        %v468 = vrot.slane %v466, 4
        %v469 = vor.u32 %v468, %v464
        %v470 = vrot.slane %v469, 4
        %v472 = vshll.u32 %v271, 16
        %v474 = vrot.slane %v472, 5
        %v475 = vsel %vm307, %v470, %v474
        %v477 = vshrl.u32 %v272, 16
        %v479 = vrot.slane %v477, 4
        %v480 = vshll.u32 %v272, 16
        %v482 = vrot.slane %v480, 5
        %v483 = vor.u32 %v479, %v482
        %v484 = vrot.slane %v483, 4
        %v486 = vshll.u32 %v273, 16
        %v488 = vrot.slane %v486, 5
        %v489 = vsel %vm307, %v484, %v488
        %v490 = vshrl.u32 %v273, 16
        %v492 = vrot.slane %v490, 4
        %v493 = vor.u32 %v492, %v488
        %v494 = vrot.slane %v493, 4
        %v496 = vshll.u32 %v274, 16
        %v498 = vrot.slane %v496, 5
        %v499 = vsel %vm307, %v494, %v498
        %v501 = vshrl.u32 %v275, 16
        %v503 = vrot.slane %v501, 4
        %v504 = vshll.u32 %v275, 16
        %v506 = vrot.slane %v504, 5
        %v507 = vor.u32 %v503, %v506
        %v508 = vrot.slane %v507, 4
        %v510 = vshll.u32 %v276, 16
        %v512 = vrot.slane %v510, 5
        %v513 = vsel %vm307, %v508, %v512
        %v514 = vshrl.u32 %v276, 16
        %v516 = vrot.slane %v514, 4
        %v517 = vor.u32 %v516, %v512
        %v518 = vrot.slane %v517, 4
        %v520 = vshll.u32 %v277, 16
        %v522 = vrot.slane %v520, 5
        %v523 = vsel %vm307, %v518, %v522
        %v525 = vshrl.u32 %v278, 16
        %v527 = vrot.slane %v525, 4
        %v528 = vshll.u32 %v278, 16
        %v530 = vrot.slane %v528, 5
        %v531 = vor.u32 %v527, %v530
        %v532 = vrot.slane %v531, 4
        %v534 = vshll.u32 %v279, 16
        %v536 = vrot.slane %v534, 5
        %v537 = vsel %vm307, %v532, %v536
        %v538 = vshrl.u32 %v279, 16
        %v540 = vrot.slane %v538, 4
        %v541 = vor.u32 %v540, %v536
        %v542 = vrot.slane %v541, 4
        %v544 = vshll.u32 %v280, 16
        %v546 = vrot.slane %v544, 5
        %v547 = vsel %vm307, %v542, %v546
        %v549 = vshrl.u32 %v281, 16
        %v551 = vrot.slane %v549, 4
        %v552 = vshll.u32 %v281, 16
        %v554 = vrot.slane %v552, 5
        %v555 = vor.u32 %v551, %v554
        %v556 = vrot.slane %v555, 4
        %v558 = vshll.u32 %v282, 16
        %v560 = vrot.slane %v558, 5
        %v561 = vsel %vm307, %v556, %v560
        %v562 = vshrl.u32 %v282, 16
        %v564 = vrot.slane %v562, 4
        %v565 = vor.u32 %v564, %v560
        %v566 = vrot.slane %v565, 4
        %v568 = vshll.u32 %v283, 16
        %v570 = vrot.slane %v568, 5
        %v571 = vsel %vm307, %v566, %v570
        %v573 = vshrl.u32 %v284, 16
        %v575 = vrot.slane %v573, 4
        %v576 = vshll.u32 %v284, 16
        %v578 = vrot.slane %v576, 5
        %v579 = vor.u32 %v575, %v578
        %v580 = vrot.slane %v579, 4
        %v582 = vshll.u32 %v285, 16
        %v584 = vrot.slane %v582, 5
        %v585 = vsel %vm307, %v580, %v584
        %v586 = vshrl.u32 %v285, 16
        %v588 = vrot.slane %v586, 4
        %v589 = vor.u32 %v588, %v584
        %v590 = vrot.slane %v589, 4
        %v592 = vshll.u32 %v286, 16
        %v594 = vrot.slane %v592, 5
        %v595 = vsel %vm307, %v590, %v594
        %v597 = vshrl.u32 %v287, 16
        %v599 = vrot.slane %v597, 4
        %v600 = vshll.u32 %v287, 16
        %v602 = vrot.slane %v600, 5
        %v603 = vor.u32 %v599, %v602
        %v604 = vrot.slane %v603, 4
        %v606 = vshll.u32 %v288, 16
        %v608 = vrot.slane %v606, 5
        %v609 = vsel %vm307, %v604, %v608
        %v610 = vshrl.u32 %v288, 16
        %v612 = vrot.slane %v610, 4
        %v613 = vor.u32 %v612, %v608
        %v614 = vrot.slane %v613, 4
        %v616 = vshll.u32 %v289, 16
        %v618 = vrot.slane %v616, 5
        %v619 = vsel %vm307, %v614, %v618
        %v621 = vshrl.u32 %v290, 16
        %v623 = vrot.slane %v621, 4
        %v624 = vshll.u32 %v290, 16
        %v626 = vrot.slane %v624, 5
        %v627 = vor.u32 %v623, %v626
        %v628 = vrot.slane %v627, 4
        %v630 = vshll.u32 %v291, 16
        %v632 = vrot.slane %v630, 5
        %v633 = vsel %vm307, %v628, %v632
        %v634 = vshrl.u32 %v291, 16
        %v636 = vrot.slane %v634, 4
        %v637 = vor.u32 %v636, %v632
        %v638 = vrot.slane %v637, 4
        %v640 = vshll.u32 %v292, 16
        %v642 = vrot.slane %v640, 5
        %v643 = vsel %vm307, %v638, %v642
        %v645 = vshrl.u32 %v293, 16
        %v647 = vrot.slane %v645, 4
        %v648 = vshll.u32 %v293, 16
        %v650 = vrot.slane %v648, 5
        %v651 = vor.u32 %v647, %v650
        %v652 = vrot.slane %v651, 4
        %v654 = vshll.u32 %v294, 16
        %v656 = vrot.slane %v654, 5
        %v657 = vsel %vm307, %v652, %v656
        %v658 = vshrl.u32 %v294, 16
        %v660 = vrot.slane %v658, 4
        %v661 = vor.u32 %v660, %v656
        %v662 = vrot.slane %v661, 4
        %v664 = vshll.u32 %v295, 16
        %v666 = vrot.slane %v664, 5
        %v667 = vsel %vm307, %v662, %v666
        %v669 = vshrl.u32 %v296, 16
        %v671 = vrot.slane %v669, 4
        %v672 = vshll.u32 %v296, 16
        %v674 = vrot.slane %v672, 5
        %v675 = vor.u32 %v671, %v674
        %v676 = vrot.slane %v675, 4
        %v678 = vshll.u32 %v297, 16
        %v680 = vrot.slane %v678, 5
        %v681 = vsel %vm307, %v676, %v680
        %v682 = vshrl.u32 %v297, 16
        %v684 = vrot.slane %v682, 4
        %v685 = vor.u32 %v684, %v680
        %v686 = vrot.slane %v685, 4
        %v688 = vshll.u32 %v298, 16
        %v690 = vrot.slane %v688, 5
        %v691 = vsel %vm307, %v686, %v690
        %vm740 = vcmask 1042432
        %vm741 = vcmask 1046532
        %vm742 = vmor %vm740, %vm741
        %v743 = vrot.slane %v251, 5
        %v744 = vrot.slane %v743, 4
        %v745 = vrot.slane %v252, 5
        %v746 = vsel %vm742, %v744, %v745
        %v747 = vrot.slane %v745, 4
        %v748 = vrot.slane %v253, 5
        %v749 = vsel %vm742, %v747, %v748
        %v750 = vrot.slane %v254, 5
        %v751 = vrot.slane %v750, 4
        %v752 = vrot.slane %v255, 5
        %v753 = vsel %vm742, %v751, %v752
        %v754 = vrot.slane %v752, 4
        %v755 = vrot.slane %v256, 5
        %v756 = vsel %vm742, %v754, %v755
        %v757 = vrot.slane %v257, 5
        %v758 = vrot.slane %v757, 4
        %v759 = vrot.slane %v258, 5
        %v760 = vsel %vm742, %v758, %v759
        %v761 = vrot.slane %v759, 4
        %v762 = vrot.slane %v259, 5
        %v763 = vsel %vm742, %v761, %v762
        %v764 = vrot.slane %v260, 5
        %v765 = vrot.slane %v764, 4
        %v766 = vrot.slane %v261, 5
        %v767 = vsel %vm742, %v765, %v766
        %v768 = vrot.slane %v766, 4
        %v769 = vrot.slane %v262, 5
        %v770 = vsel %vm742, %v768, %v769
        %v771 = vrot.slane %v263, 5
        %v772 = vrot.slane %v771, 4
        %v773 = vrot.slane %v264, 5
        %v774 = vsel %vm742, %v772, %v773
        %v775 = vrot.slane %v773, 4
        %v776 = vrot.slane %v265, 5
        %v777 = vsel %vm742, %v775, %v776
        %v778 = vrot.slane %v266, 5
        %v779 = vrot.slane %v778, 4
        %v780 = vrot.slane %v267, 5
        %v781 = vsel %vm742, %v779, %v780
        %v782 = vrot.slane %v780, 4
        %v783 = vrot.slane %v268, 5
        %v784 = vsel %vm742, %v782, %v783
        %v785 = vrot.slane %v269, 5
        %v786 = vrot.slane %v785, 4
        %v787 = vrot.slane %v270, 5
        %v788 = vsel %vm742, %v786, %v787
        %v789 = vrot.slane %v787, 4
        %v790 = vrot.slane %v271, 5
        %v791 = vsel %vm742, %v789, %v790
        %v792 = vrot.slane %v272, 5
        %v793 = vrot.slane %v792, 4
        %v794 = vrot.slane %v273, 5
        %v795 = vsel %vm742, %v793, %v794
        %v796 = vrot.slane %v794, 4
        %v797 = vrot.slane %v274, 5
        %v798 = vsel %vm742, %v796, %v797
        %v799 = vrot.slane %v275, 5
        %v800 = vrot.slane %v799, 4
        %v801 = vrot.slane %v276, 5
        %v802 = vsel %vm742, %v800, %v801
        %v803 = vrot.slane %v801, 4
        %v804 = vrot.slane %v277, 5
        %v805 = vsel %vm742, %v803, %v804
        %v806 = vrot.slane %v278, 5
        %v807 = vrot.slane %v806, 4
        %v808 = vrot.slane %v279, 5
        %v809 = vsel %vm742, %v807, %v808
        %v810 = vrot.slane %v808, 4
        %v811 = vrot.slane %v280, 5
        %v812 = vsel %vm742, %v810, %v811
        %v813 = vrot.slane %v281, 5
        %v814 = vrot.slane %v813, 4
        %v815 = vrot.slane %v282, 5
        %v816 = vsel %vm742, %v814, %v815
        %v817 = vrot.slane %v815, 4
        %v818 = vrot.slane %v283, 5
        %v819 = vsel %vm742, %v817, %v818
        %v820 = vrot.slane %v284, 5
        %v821 = vrot.slane %v820, 4
        %v822 = vrot.slane %v285, 5
        %v823 = vsel %vm742, %v821, %v822
        %v824 = vrot.slane %v822, 4
        %v825 = vrot.slane %v286, 5
        %v826 = vsel %vm742, %v824, %v825
        %v827 = vrot.slane %v287, 5
        %v828 = vrot.slane %v827, 4
        %v829 = vrot.slane %v288, 5
        %v830 = vsel %vm742, %v828, %v829
        %v831 = vrot.slane %v829, 4
        %v832 = vrot.slane %v289, 5
        %v833 = vsel %vm742, %v831, %v832
        %v834 = vrot.slane %v290, 5
        %v835 = vrot.slane %v834, 4
        %v836 = vrot.slane %v291, 5
        %v837 = vsel %vm742, %v835, %v836
        %v838 = vrot.slane %v836, 4
        %v839 = vrot.slane %v292, 5
        %v840 = vsel %vm742, %v838, %v839
        %v841 = vrot.slane %v293, 5
        %v842 = vrot.slane %v841, 4
        %v843 = vrot.slane %v294, 5
        %v844 = vsel %vm742, %v842, %v843
        %v845 = vrot.slane %v843, 4
        %v846 = vrot.slane %v295, 5
        %v847 = vsel %vm742, %v845, %v846
        %v848 = vrot.slane %v296, 5
        %v849 = vrot.slane %v848, 4
        %v850 = vrot.slane %v297, 5
        %v851 = vsel %vm742, %v849, %v850
        %v852 = vrot.slane %v850, 4
        %v853 = vrot.slane %v298, 5
        %v854 = vsel %vm742, %v852, %v853
        %v856 = vshrl.u32 %v299, 16
        %v858 = vrot.slane %v856, 4
        %v859 = vshll.u32 %v299, 16
        %v861 = vrot.slane %v859, 5
        %v862 = vor.u32 %v858, %v861
        %v863 = vrot.slane %v862, 4
        %v865 = vshll.u32 %v300, 16
        %v867 = vrot.slane %v865, 5
        %v868 = vsel %vm307, %v863, %v867
        %v869 = vshrl.u32 %v300, 16
        %v871 = vrot.slane %v869, 4
        %v872 = vor.u32 %v871, %v867
        %v873 = vrot.slane %v872, 4
        %v875 = vshll.u32 %v301, 16
        %v877 = vrot.slane %v875, 5
        %v878 = vsel %vm307, %v873, %v877
        %v882 = vrot.slane %v299, 5
        %v883 = vrot.slane %v882, 4
        %v884 = vrot.slane %v300, 5
        %v885 = vsel %vm742, %v883, %v884
        %v886 = vrot.slane %v884, 4
        %v887 = vrot.slane %v301, 5
        %v888 = vsel %vm742, %v886, %v887
        %v890 = vshrl.u32 %v302, 16
        %v892 = vrot.slane %v890, 4
        %v893 = vshll.u32 %v302, 16
        %v895 = vrot.slane %v893, 5
        %v896 = vor.u32 %v892, %v895
        %v897 = vrot.slane %v896, 4
        %v899 = vshll.u32 %v303, 16
        %v901 = vrot.slane %v899, 5
        %v902 = vsel %vm307, %v897, %v901
        %v903 = vshrl.u32 %v303, 16
        %v905 = vrot.slane %v903, 4
        %v906 = vor.u32 %v905, %v901
        %v907 = vrot.slane %v906, 4
        %v909 = vshll.u32 %v304, 16
        %v911 = vrot.slane %v909, 5
        %v912 = vsel %vm307, %v907, %v911
        %v916 = vrot.slane %v302, 5
        %v917 = vrot.slane %v916, 4
        %v918 = vrot.slane %v303, 5
        %v919 = vsel %vm742, %v917, %v918
        %v920 = vrot.slane %v918, 4
        %v921 = vrot.slane %v304, 5
        %v922 = vsel %vm742, %v920, %v921
        %v923 = vunpack.c.l.b16 %v251
        %v924 = vunpack.c.l.b16 %v252
        %v925 = vunpack.c.l.b16 %v254
        %v926 = vunpack.c.l.b16 %v255
        %v927 = vunpack.c.l.b16 %v257
        %v928 = vunpack.c.l.b16 %v258
        %v929 = vunpack.c.l.b16 %v260
        %v930 = vunpack.c.l.b16 %v261
        %v931 = vunpack.c.l.b16 %v263
        %v932 = vunpack.c.l.b16 %v264
        %v933 = vunpack.c.l.b16 %v266
        %v934 = vunpack.c.l.b16 %v267
        %v935 = vunpack.c.l.b16 %v269
        %v936 = vunpack.c.l.b16 %v270
        %v937 = vunpack.c.l.b16 %v272
        %v938 = vunpack.c.l.b16 %v273
        %v939 = vunpack.c.l.b16 %v275
        %v940 = vunpack.c.l.b16 %v276
        %v941 = vunpack.c.l.b16 %v278
        %v942 = vunpack.c.l.b16 %v279
        %v943 = vunpack.c.l.b16 %v281
        %v944 = vunpack.c.l.b16 %v282
        %v945 = vunpack.c.l.b16 %v284
        %v946 = vunpack.c.l.b16 %v285
        %v947 = vunpack.c.l.b16 %v287
        %v948 = vunpack.c.l.b16 %v288
        %v949 = vunpack.c.l.b16 %v290
        %v950 = vunpack.c.l.b16 %v291
        %v951 = vunpack.c.l.b16 %v293
        %v952 = vunpack.c.l.b16 %v294
        %v953 = vunpack.c.l.b16 %v296
        %v954 = vunpack.c.l.b16 %v297
        %v955 = vpack.c.b16 %v924, %v923
        %v956 = vpack.c.b16 %v926, %v925
        %v957 = vpack.c.b16 %v928, %v927
        %v958 = vpack.c.b16 %v930, %v929
        %v959 = vpack.c.b16 %v932, %v931
        %v960 = vpack.c.b16 %v934, %v933
        %v961 = vpack.c.b16 %v936, %v935
        %v962 = vpack.c.b16 %v938, %v937
        %v963 = vpack.c.b16 %v940, %v939
        %v964 = vpack.c.b16 %v942, %v941
        %v965 = vpack.c.b16 %v944, %v943
        %v966 = vpack.c.b16 %v946, %v945
        %v967 = vpack.c.b16 %v948, %v947
        %v968 = vpack.c.b16 %v950, %v949
        %v969 = vpack.c.b16 %v952, %v951
        %v970 = vpack.c.b16 %v954, %v953
        %v971 = vunpack.c.l.b16 %v321
        %v972 = vunpack.c.l.b16 %v331
        %v973 = vunpack.c.l.b16 %v345
        %v974 = vunpack.c.l.b16 %v355
        %v975 = vunpack.c.l.b16 %v369
        %v976 = vunpack.c.l.b16 %v379
        %v977 = vunpack.c.l.b16 %v393
        %v978 = vunpack.c.l.b16 %v403
        %v979 = vunpack.c.l.b16 %v417
        %v980 = vunpack.c.l.b16 %v427
        %v981 = vunpack.c.l.b16 %v441
        %v982 = vunpack.c.l.b16 %v451
        %v983 = vunpack.c.l.b16 %v465
        %v984 = vunpack.c.l.b16 %v475
        %v985 = vunpack.c.l.b16 %v489
        %v986 = vunpack.c.l.b16 %v499
        %v987 = vunpack.c.l.b16 %v513
        %v988 = vunpack.c.l.b16 %v523
        %v989 = vunpack.c.l.b16 %v537
        %v990 = vunpack.c.l.b16 %v547
        %v991 = vunpack.c.l.b16 %v561
        %v992 = vunpack.c.l.b16 %v571
        %v993 = vunpack.c.l.b16 %v585
        %v994 = vunpack.c.l.b16 %v595
        %v995 = vunpack.c.l.b16 %v609
        %v996 = vunpack.c.l.b16 %v619
        %v997 = vunpack.c.l.b16 %v633
        %v998 = vunpack.c.l.b16 %v643
        %v999 = vunpack.c.l.b16 %v657
        %v1000 = vunpack.c.l.b16 %v667
        %v1001 = vunpack.c.l.b16 %v681
        %v1002 = vunpack.c.l.b16 %v691
        %v1003 = vpack.c.b16 %v972, %v971
        %v1004 = vpack.c.b16 %v974, %v973
        %v1005 = vpack.c.b16 %v976, %v975
        %v1006 = vpack.c.b16 %v978, %v977
        %v1007 = vpack.c.b16 %v980, %v979
        %v1008 = vpack.c.b16 %v982, %v981
        %v1009 = vpack.c.b16 %v984, %v983
        %v1010 = vpack.c.b16 %v986, %v985
        %v1011 = vpack.c.b16 %v988, %v987
        %v1012 = vpack.c.b16 %v990, %v989
        %v1013 = vpack.c.b16 %v992, %v991
        %v1014 = vpack.c.b16 %v994, %v993
        %v1015 = vpack.c.b16 %v996, %v995
        %v1016 = vpack.c.b16 %v998, %v997
        %v1017 = vpack.c.b16 %v1000, %v999
        %v1018 = vpack.c.b16 %v1002, %v1001
        %1019 = vrot.lane.b32.xlu0 %v1003, 32
        %v1020 = vpop.permute.xlu0 %1019
        %1021 = vrot.lane.b32.xlu0 %v1004, 32
        %v1022 = vpop.permute.xlu0 %1021
        %1023 = vrot.lane.b32.xlu0 %v1005, 32
        %v1024 = vpop.permute.xlu0 %1023
        %1025 = vrot.lane.b32.xlu0 %v1006, 32
        %v1026 = vpop.permute.xlu0 %1025
        %1027 = vrot.lane.b32.xlu0 %v1007, 32
        %v1028 = vpop.permute.xlu0 %1027
        %1029 = vrot.lane.b32.xlu0 %v1008, 32
        %v1030 = vpop.permute.xlu0 %1029
        %1031 = vrot.lane.b32.xlu0 %v1009, 32
        %v1032 = vpop.permute.xlu0 %1031
        %1033 = vrot.lane.b32.xlu0 %v1010, 32
        %v1034 = vpop.permute.xlu0 %1033
        %1035 = vrot.lane.b32.xlu0 %v1011, 32
        %v1036 = vpop.permute.xlu0 %1035
        %1037 = vrot.lane.b32.xlu0 %v1012, 32
        %v1038 = vpop.permute.xlu0 %1037
        %1039 = vrot.lane.b32.xlu0 %v1013, 32
        %v1040 = vpop.permute.xlu0 %1039
        %1041 = vrot.lane.b32.xlu0 %v1014, 32
        %v1042 = vpop.permute.xlu0 %1041
        %1043 = vrot.lane.b32.xlu0 %v1015, 32
        %v1044 = vpop.permute.xlu0 %1043
        %1045 = vrot.lane.b32.xlu0 %v1016, 32
        %v1046 = vpop.permute.xlu0 %1045
        %1047 = vrot.lane.b32.xlu0 %v1017, 32
        %v1048 = vpop.permute.xlu0 %1047
        %1049 = vrot.lane.b32.xlu0 %v1018, 32
        %v1050 = vpop.permute.xlu0 %1049
        %v1051 = vunpack.c.l.b16 %v746
        %v1052 = vunpack.c.l.b16 %v749
        %v1053 = vunpack.c.l.b16 %v753
        %v1054 = vunpack.c.l.b16 %v756
        %v1055 = vunpack.c.l.b16 %v760
        %v1056 = vunpack.c.l.b16 %v763
        %v1057 = vunpack.c.l.b16 %v767
        %v1058 = vunpack.c.l.b16 %v770
        %v1059 = vunpack.c.l.b16 %v774
        %v1060 = vunpack.c.l.b16 %v777
        %v1061 = vunpack.c.l.b16 %v781
        %v1062 = vunpack.c.l.b16 %v784
        %v1063 = vunpack.c.l.b16 %v788
        %v1064 = vunpack.c.l.b16 %v791
        %v1065 = vunpack.c.l.b16 %v795
        %v1066 = vunpack.c.l.b16 %v798
        %v1067 = vunpack.c.l.b16 %v802
        %v1068 = vunpack.c.l.b16 %v805
        %v1069 = vunpack.c.l.b16 %v809
        %v1070 = vunpack.c.l.b16 %v812
        %v1071 = vunpack.c.l.b16 %v816
        %v1072 = vunpack.c.l.b16 %v819
        %v1073 = vunpack.c.l.b16 %v823
        %v1074 = vunpack.c.l.b16 %v826
        %v1075 = vunpack.c.l.b16 %v830
        %v1076 = vunpack.c.l.b16 %v833
        %v1077 = vunpack.c.l.b16 %v837
        %v1078 = vunpack.c.l.b16 %v840
        %v1079 = vunpack.c.l.b16 %v844
        %v1080 = vunpack.c.l.b16 %v847
        %v1081 = vunpack.c.l.b16 %v851
        %v1082 = vunpack.c.l.b16 %v854
        %v1083 = vpack.c.b16 %v1052, %v1051
        %v1084 = vpack.c.b16 %v1054, %v1053
        %v1085 = vpack.c.b16 %v1056, %v1055
        %v1086 = vpack.c.b16 %v1058, %v1057
        %v1087 = vpack.c.b16 %v1060, %v1059
        %v1088 = vpack.c.b16 %v1062, %v1061
        %v1089 = vpack.c.b16 %v1064, %v1063
        %v1090 = vpack.c.b16 %v1066, %v1065
        %v1091 = vpack.c.b16 %v1068, %v1067
        %v1092 = vpack.c.b16 %v1070, %v1069
        %v1093 = vpack.c.b16 %v1072, %v1071
        %v1094 = vpack.c.b16 %v1074, %v1073
        %v1095 = vpack.c.b16 %v1076, %v1075
        %v1096 = vpack.c.b16 %v1078, %v1077
        %v1097 = vpack.c.b16 %v1080, %v1079
        %v1098 = vpack.c.b16 %v1082, %v1081
        %1099 = vrot.lane.b32.xlu0 %v1083, 64
        %v1100 = vpop.permute.xlu0 %1099
        %1101 = vrot.lane.b32.xlu0 %v1084, 64
        %v1102 = vpop.permute.xlu0 %1101
        %1103 = vrot.lane.b32.xlu0 %v1085, 64
        %v1104 = vpop.permute.xlu0 %1103
        %1105 = vrot.lane.b32.xlu0 %v1086, 64
        %v1106 = vpop.permute.xlu0 %1105
        %1107 = vrot.lane.b32.xlu0 %v1087, 64
        %v1108 = vpop.permute.xlu0 %1107
        %1109 = vrot.lane.b32.xlu0 %v1088, 64
        %v1110 = vpop.permute.xlu0 %1109
        %1111 = vrot.lane.b32.xlu0 %v1089, 64
        %v1112 = vpop.permute.xlu0 %1111
        %1113 = vrot.lane.b32.xlu0 %v1090, 64
        %v1114 = vpop.permute.xlu0 %1113
        %1115 = vrot.lane.b32.xlu0 %v1091, 64
        %v1116 = vpop.permute.xlu0 %1115
        %1117 = vrot.lane.b32.xlu0 %v1092, 64
        %v1118 = vpop.permute.xlu0 %1117
        %1119 = vrot.lane.b32.xlu0 %v1093, 64
        %v1120 = vpop.permute.xlu0 %1119
        %1121 = vrot.lane.b32.xlu0 %v1094, 64
        %v1122 = vpop.permute.xlu0 %1121
        %1123 = vrot.lane.b32.xlu0 %v1095, 64
        %v1124 = vpop.permute.xlu0 %1123
        %1125 = vrot.lane.b32.xlu0 %v1096, 64
        %v1126 = vpop.permute.xlu0 %1125
        %1127 = vrot.lane.b32.xlu0 %v1097, 64
        %v1128 = vpop.permute.xlu0 %1127
        %1129 = vrot.lane.b32.xlu0 %v1098, 64
        %v1130 = vpop.permute.xlu0 %1129
        %v1131 = vunpack.c.l.b16 %v299
        %v1132 = vunpack.c.l.b16 %v300
        %v1133 = vpack.c.b16 %v1132, %v1131
        %1134 = vrot.lane.b32.xlu0 %v956, 96
        %v1135 = vpop.permute.xlu0 %1134
        %1136 = vrot.lane.b32.xlu0 %v957, 96
        %v1137 = vpop.permute.xlu0 %1136
        %1138 = vrot.lane.b32.xlu0 %v958, 96
        %v1139 = vpop.permute.xlu0 %1138
        %1140 = vrot.lane.b32.xlu0 %v959, 96
        %v1141 = vpop.permute.xlu0 %1140
        %1142 = vrot.lane.b32.xlu0 %v960, 96
        %v1143 = vpop.permute.xlu0 %1142
        %1144 = vrot.lane.b32.xlu0 %v961, 96
        %v1145 = vpop.permute.xlu0 %1144
        %1146 = vrot.lane.b32.xlu0 %v962, 96
        %v1147 = vpop.permute.xlu0 %1146
        %1148 = vrot.lane.b32.xlu0 %v963, 96
        %v1149 = vpop.permute.xlu0 %1148
        %1150 = vrot.lane.b32.xlu0 %v964, 96
        %v1151 = vpop.permute.xlu0 %1150
        %1152 = vrot.lane.b32.xlu0 %v965, 96
        %v1153 = vpop.permute.xlu0 %1152
        %1154 = vrot.lane.b32.xlu0 %v966, 96
        %v1155 = vpop.permute.xlu0 %1154
        %1156 = vrot.lane.b32.xlu0 %v967, 96
        %v1157 = vpop.permute.xlu0 %1156
        %1158 = vrot.lane.b32.xlu0 %v968, 96
        %v1159 = vpop.permute.xlu0 %1158
        %1160 = vrot.lane.b32.xlu0 %v969, 96
        %v1161 = vpop.permute.xlu0 %1160
        %1162 = vrot.lane.b32.xlu0 %v970, 96
        %v1163 = vpop.permute.xlu0 %1162
        %1164 = vrot.lane.b32.xlu0 %v1133, 96
        %v1165 = vpop.permute.xlu0 %1164
        %v1166 = vunpack.c.l.b16 %v868
        %v1167 = vunpack.c.l.b16 %v878
        %v1168 = vpack.c.b16 %v1167, %v1166
        %v1169 = vunpack.c.l.b16 %v885
        %v1170 = vunpack.c.l.b16 %v888
        %v1171 = vpack.c.b16 %v1170, %v1169
        %1172 = vrot.lane.b32.xlu0 %v1084, 32
        %v1173 = vpop.permute.xlu0 %1172
        %1174 = vrot.lane.b32.xlu0 %v1085, 32
        %v1175 = vpop.permute.xlu0 %1174
        %1176 = vrot.lane.b32.xlu0 %v1086, 32
        %v1177 = vpop.permute.xlu0 %1176
        %1178 = vrot.lane.b32.xlu0 %v1087, 32
        %v1179 = vpop.permute.xlu0 %1178
        %1180 = vrot.lane.b32.xlu0 %v1088, 32
        %v1181 = vpop.permute.xlu0 %1180
        %1182 = vrot.lane.b32.xlu0 %v1089, 32
        %v1183 = vpop.permute.xlu0 %1182
        %1184 = vrot.lane.b32.xlu0 %v1090, 32
        %v1185 = vpop.permute.xlu0 %1184
        %1186 = vrot.lane.b32.xlu0 %v1091, 32
        %v1187 = vpop.permute.xlu0 %1186
        %1188 = vrot.lane.b32.xlu0 %v1092, 32
        %v1189 = vpop.permute.xlu0 %1188
        %1190 = vrot.lane.b32.xlu0 %v1093, 32
        %v1191 = vpop.permute.xlu0 %1190
        %1192 = vrot.lane.b32.xlu0 %v1094, 32
        %v1193 = vpop.permute.xlu0 %1192
        %1194 = vrot.lane.b32.xlu0 %v1095, 32
        %v1195 = vpop.permute.xlu0 %1194
        %1196 = vrot.lane.b32.xlu0 %v1096, 32
        %v1197 = vpop.permute.xlu0 %1196
        %1198 = vrot.lane.b32.xlu0 %v1097, 32
        %v1199 = vpop.permute.xlu0 %1198
        %1200 = vrot.lane.b32.xlu0 %v1098, 32
        %v1201 = vpop.permute.xlu0 %1200
        %1202 = vrot.lane.b32.xlu0 %v1171, 32
        %v1203 = vpop.permute.xlu0 %1202
        %v1204 = vunpack.c.l.b16 %v302
        %v1205 = vunpack.c.l.b16 %v303
        %v1206 = vpack.c.b16 %v1205, %v1204
        %1207 = vrot.lane.b32.xlu0 %v957, 64
        %v1208 = vpop.permute.xlu0 %1207
        %1209 = vrot.lane.b32.xlu0 %v958, 64
        %v1210 = vpop.permute.xlu0 %1209
        %1211 = vrot.lane.b32.xlu0 %v959, 64
        %v1212 = vpop.permute.xlu0 %1211
        %1213 = vrot.lane.b32.xlu0 %v960, 64
        %v1214 = vpop.permute.xlu0 %1213
        %1215 = vrot.lane.b32.xlu0 %v961, 64
        %v1216 = vpop.permute.xlu0 %1215
        %1217 = vrot.lane.b32.xlu0 %v962, 64
        %v1218 = vpop.permute.xlu0 %1217
        %1219 = vrot.lane.b32.xlu0 %v963, 64
        %v1220 = vpop.permute.xlu0 %1219
        %1221 = vrot.lane.b32.xlu0 %v964, 64
        %v1222 = vpop.permute.xlu0 %1221
        %1223 = vrot.lane.b32.xlu0 %v965, 64
        %v1224 = vpop.permute.xlu0 %1223
        %1225 = vrot.lane.b32.xlu0 %v966, 64
        %v1226 = vpop.permute.xlu0 %1225
        %1227 = vrot.lane.b32.xlu0 %v967, 64
        %v1228 = vpop.permute.xlu0 %1227
        %1229 = vrot.lane.b32.xlu0 %v968, 64
        %v1230 = vpop.permute.xlu0 %1229
        %1231 = vrot.lane.b32.xlu0 %v969, 64
        %v1232 = vpop.permute.xlu0 %1231
        %1233 = vrot.lane.b32.xlu0 %v970, 64
        %v1234 = vpop.permute.xlu0 %1233
        %1235 = vrot.lane.b32.xlu0 %v1133, 64
        %v1236 = vpop.permute.xlu0 %1235
        %1237 = vrot.lane.b32.xlu0 %v1206, 64
        %v1238 = vpop.permute.xlu0 %1237
        %v1239 = vunpack.c.l.b16 %v902
        %v1240 = vunpack.c.l.b16 %v912
        %v1241 = vpack.c.b16 %v1240, %v1239
        %1242 = vrot.lane.b32.xlu0 %v1005, 96
        %v1243 = vpop.permute.xlu0 %1242
        %1244 = vrot.lane.b32.xlu0 %v1006, 96
        %v1245 = vpop.permute.xlu0 %1244
        %1246 = vrot.lane.b32.xlu0 %v1007, 96
        %v1247 = vpop.permute.xlu0 %1246
        %1248 = vrot.lane.b32.xlu0 %v1008, 96
        %v1249 = vpop.permute.xlu0 %1248
        %1250 = vrot.lane.b32.xlu0 %v1009, 96
        %v1251 = vpop.permute.xlu0 %1250
        %1252 = vrot.lane.b32.xlu0 %v1010, 96
        %v1253 = vpop.permute.xlu0 %1252
        %1254 = vrot.lane.b32.xlu0 %v1011, 96
        %v1255 = vpop.permute.xlu0 %1254
        %1256 = vrot.lane.b32.xlu0 %v1012, 96
        %v1257 = vpop.permute.xlu0 %1256
        %1258 = vrot.lane.b32.xlu0 %v1013, 96
        %v1259 = vpop.permute.xlu0 %1258
        %1260 = vrot.lane.b32.xlu0 %v1014, 96
        %v1261 = vpop.permute.xlu0 %1260
        %1262 = vrot.lane.b32.xlu0 %v1015, 96
        %v1263 = vpop.permute.xlu0 %1262
        %1264 = vrot.lane.b32.xlu0 %v1016, 96
        %v1265 = vpop.permute.xlu0 %1264
        %1266 = vrot.lane.b32.xlu0 %v1017, 96
        %v1267 = vpop.permute.xlu0 %1266
        %1268 = vrot.lane.b32.xlu0 %v1018, 96
        %v1269 = vpop.permute.xlu0 %1268
        %1270 = vrot.lane.b32.xlu0 %v1168, 96
        %v1271 = vpop.permute.xlu0 %1270
        %1272 = vrot.lane.b32.xlu0 %v1241, 96
        %v1273 = vpop.permute.xlu0 %1272
        %v1274 = vunpack.c.l.b16 %v919
        %v1275 = vunpack.c.l.b16 %v922
        %v1276 = vpack.c.b16 %v1275, %v1274
        %vm1277 = vcmask 261120
        %v1280 = vsel %vm1277, %v955, %v1020
        %v1283 = vsel %vm1277, %v956, %v1022
        %v1286 = vsel %vm1277, %v957, %v1024
        %v1289 = vsel %vm1277, %v958, %v1026
        %v1292 = vsel %vm1277, %v959, %v1028
        %v1295 = vsel %vm1277, %v960, %v1030
        %v1298 = vsel %vm1277, %v961, %v1032
        %v1301 = vsel %vm1277, %v962, %v1034
        %v1304 = vsel %vm1277, %v963, %v1036
        %v1307 = vsel %vm1277, %v964, %v1038
        %v1310 = vsel %vm1277, %v965, %v1040
        %v1313 = vsel %vm1277, %v966, %v1042
        %v1316 = vsel %vm1277, %v967, %v1044
        %v1319 = vsel %vm1277, %v968, %v1046
        %v1322 = vsel %vm1277, %v969, %v1048
        %v1325 = vsel %vm1277, %v970, %v1050
        %vm1326 = vcmask 523264
        %v1328 = vsel %vm1326, %v1280, %v1100
        %v1330 = vsel %vm1326, %v1283, %v1102
        %v1332 = vsel %vm1326, %v1286, %v1104
        %v1334 = vsel %vm1326, %v1289, %v1106
        %v1336 = vsel %vm1326, %v1292, %v1108
        %v1338 = vsel %vm1326, %v1295, %v1110
        %v1340 = vsel %vm1326, %v1298, %v1112
        %v1342 = vsel %vm1326, %v1301, %v1114
        %v1344 = vsel %vm1326, %v1304, %v1116
        %v1346 = vsel %vm1326, %v1307, %v1118
        %v1348 = vsel %vm1326, %v1310, %v1120
        %v1350 = vsel %vm1326, %v1313, %v1122
        %v1352 = vsel %vm1326, %v1316, %v1124
        %v1354 = vsel %vm1326, %v1319, %v1126
        %v1356 = vsel %vm1326, %v1322, %v1128
        %v1358 = vsel %vm1326, %v1325, %v1130
        %vm1359 = vcmask 785408
        %v1361 = vsel %vm1359, %v1328, %v1135
        %v1364 = vsel %vm1359, %v1330, %v1137
        %v1367 = vsel %vm1359, %v1332, %v1139
        %v1370 = vsel %vm1359, %v1334, %v1141
        %v1373 = vsel %vm1359, %v1336, %v1143
        %v1376 = vsel %vm1359, %v1338, %v1145
        %v1379 = vsel %vm1359, %v1340, %v1147
        %v1382 = vsel %vm1359, %v1342, %v1149
        %v1385 = vsel %vm1359, %v1344, %v1151
        %v1388 = vsel %vm1359, %v1346, %v1153
        %v1391 = vsel %vm1359, %v1348, %v1155
        %v1394 = vsel %vm1359, %v1350, %v1157
        %v1397 = vsel %vm1359, %v1352, %v1159
        %v1400 = vsel %vm1359, %v1354, %v1161
        %v1403 = vsel %vm1359, %v1356, %v1163
        %v1406 = vsel %vm1359, %v1358, %v1165
        %v1410 = vsel %vm1277, %v1004, %v1173
        %v1413 = vsel %vm1277, %v1005, %v1175
        %v1416 = vsel %vm1277, %v1006, %v1177
        %v1419 = vsel %vm1277, %v1007, %v1179
        %v1422 = vsel %vm1277, %v1008, %v1181
        %v1425 = vsel %vm1277, %v1009, %v1183
        %v1428 = vsel %vm1277, %v1010, %v1185
        %v1431 = vsel %vm1277, %v1011, %v1187
        %v1434 = vsel %vm1277, %v1012, %v1189
        %v1437 = vsel %vm1277, %v1013, %v1191
        %v1440 = vsel %vm1277, %v1014, %v1193
        %v1443 = vsel %vm1277, %v1015, %v1195
        %v1446 = vsel %vm1277, %v1016, %v1197
        %v1449 = vsel %vm1277, %v1017, %v1199
        %v1452 = vsel %vm1277, %v1018, %v1201
        %v1455 = vsel %vm1277, %v1168, %v1203
        %v1457 = vsel %vm1326, %v1410, %v1208
        %v1459 = vsel %vm1326, %v1413, %v1210
        %v1461 = vsel %vm1326, %v1416, %v1212
        %v1463 = vsel %vm1326, %v1419, %v1214
        %v1465 = vsel %vm1326, %v1422, %v1216
        %v1467 = vsel %vm1326, %v1425, %v1218
        %v1469 = vsel %vm1326, %v1428, %v1220
        %v1471 = vsel %vm1326, %v1431, %v1222
        %v1473 = vsel %vm1326, %v1434, %v1224
        %v1475 = vsel %vm1326, %v1437, %v1226
        %v1477 = vsel %vm1326, %v1440, %v1228
        %v1479 = vsel %vm1326, %v1443, %v1230
        %v1481 = vsel %vm1326, %v1446, %v1232
        %v1483 = vsel %vm1326, %v1449, %v1234
        %v1485 = vsel %vm1326, %v1452, %v1236
        %v1487 = vsel %vm1326, %v1455, %v1238
        %v1489 = vsel %vm1359, %v1457, %v1243
        %v1492 = vsel %vm1359, %v1459, %v1245
        %v1495 = vsel %vm1359, %v1461, %v1247
        %v1498 = vsel %vm1359, %v1463, %v1249
        %v1501 = vsel %vm1359, %v1465, %v1251
        %v1504 = vsel %vm1359, %v1467, %v1253
        %v1507 = vsel %vm1359, %v1469, %v1255
        %v1510 = vsel %vm1359, %v1471, %v1257
        %v1513 = vsel %vm1359, %v1473, %v1259
        %v1516 = vsel %vm1359, %v1475, %v1261
        %v1519 = vsel %vm1359, %v1477, %v1263
        %v1522 = vsel %vm1359, %v1479, %v1265
        %v1525 = vsel %vm1359, %v1481, %v1267
        %v1528 = vsel %vm1359, %v1483, %v1269
        %v1531 = vsel %vm1359, %v1485, %v1271
        %v1534 = vsel %vm1359, %v1487, %v1273
        %v1536 = vld [vmem:[%s1] sm:$0xf]
        %v1537 = vld [vmem:[%s1 + $0x4] sm:$0xf]
        %v1538 = vld [vmem:[%s1 + $0x8] sm:$0xf]
        %v1539 = vld [vmem:[%s1 + $0xc] sm:$0xf]
        %v1540 = vld [vmem:[%s1 + $0x10] sm:$0xf]
        %v1541 = vld [vmem:[%s1 + $0x14] sm:$0xf]
        %v1542 = vld [vmem:[%s1 + $0x18] sm:$0xf]
        %v1543 = vld [vmem:[%s1 + $0x1c] sm:$0xf]
        %v1544 = vld [vmem:[%s1 + $0x20] sm:$0xf]
        %v1545 = vld [vmem:[%s1 + $0x24] sm:$0xf]
        %v1546 = vld [vmem:[%s1 + $0x28] sm:$0xf]
        %v1547 = vld [vmem:[%s1 + $0x2c] sm:$0xf]
        %v1548 = vld [vmem:[%s1 + $0x30] sm:$0xf]
        %v1549 = vld [vmem:[%s1 + $0x34] sm:$0xf]
        %v1550 = vld [vmem:[%s1 + $0x38] sm:$0xf]
        %v1551 = vld [vmem:[%s1 + $0x3c] sm:$0xf]
        %v1552 = vld [vmem:[%s1 + $0x40] sm:$0xf]
        %v1553 = vld [vmem:[%s1 + $0x44] sm:$0xf]
        %v1554 = vld [vmem:[%s1 + $0x48] sm:$0xf]
        %v1555 = vld [vmem:[%s1 + $0x4c] sm:$0xf]
        %v1556 = vld [vmem:[%s1 + $0x50] sm:$0xf]
        %v1557 = vld [vmem:[%s1 + $0x54] sm:$0xf]
        %v1558 = vld [vmem:[%s1 + $0x58] sm:$0xf]
        %v1559 = vld [vmem:[%s1 + $0x5c] sm:$0xf]
        %v1560 = vld [vmem:[%s1 + $0x60] sm:$0xf]
        %v1561 = vld [vmem:[%s1 + $0x64] sm:$0xf]
        %v1562 = vld [vmem:[%s1 + $0x68] sm:$0xf]
        %v1563 = vld [vmem:[%s1 + $0x6c] sm:$0xf]
        %v1564 = vld [vmem:[%s1 + $0x70] sm:$0xf]
        %v1565 = vld [vmem:[%s1 + $0x74] sm:$0xf]
        %v1566 = vld [vmem:[%s1 + $0x78] sm:$0xf]
        %v1567 = vld [vmem:[%s1 + $0x7c] sm:$0xf]
        %v1568 = vld [vmem:[%s1 + $0x80] sm:$0xf]
        %v1569 = vld [vmem:[%s1 + $0x84] sm:$0xf]
        %v1570 = vld [vmem:[%s1 + $0x88] sm:$0xf]
        %v1571 = vld [vmem:[%s1 + $0x8c] sm:$0xf]
        %v1608 = vunpack.c.l.b16 %v1536
        %v1609 = vunpack.c.l.b16 %v1537
        %v1610 = vunpack.c.l.b16 %v1538
        %v1611 = vunpack.c.l.b16 %v1539
        %v1612 = vunpack.c.l.b16 %v1540
        %v1613 = vunpack.c.l.b16 %v1541
        %v1614 = vunpack.c.l.b16 %v1542
        %v1615 = vunpack.c.l.b16 %v1543
        %v1616 = vunpack.c.l.b16 %v1544
        %v1617 = vunpack.c.l.b16 %v1545
        %v1618 = vunpack.c.l.b16 %v1546
        %v1619 = vunpack.c.l.b16 %v1547
        %v1620 = vunpack.c.l.b16 %v1548
        %v1621 = vunpack.c.l.b16 %v1549
        %v1622 = vunpack.c.l.b16 %v1550
        %v1623 = vunpack.c.l.b16 %v1551
        %v1624 = vunpack.c.l.b16 %v1552
        %v1625 = vunpack.c.l.b16 %v1553
        %v1626 = vunpack.c.l.b16 %v1554
        %v1627 = vunpack.c.l.b16 %v1555
        %v1628 = vunpack.c.l.b16 %v1556
        %v1629 = vunpack.c.l.b16 %v1557
        %v1630 = vunpack.c.l.b16 %v1558
        %v1631 = vunpack.c.l.b16 %v1559
        %v1632 = vunpack.c.l.b16 %v1560
        %v1633 = vunpack.c.l.b16 %v1561
        %v1634 = vunpack.c.l.b16 %v1562
        %v1635 = vunpack.c.l.b16 %v1563
        %v1636 = vunpack.c.l.b16 %v1564
        %v1637 = vunpack.c.l.b16 %v1565
        %v1638 = vunpack.c.l.b16 %v1566
        %v1639 = vunpack.c.l.b16 %v1567
        %v1640 = vunpack.c.l.b16 %v1568
        %v1641 = vunpack.c.l.b16 %v1569
        %v1642 = vunpack.c.l.b16 %v1570
        %v1643 = vunpack.c.l.b16 %v1571
        %v1644 = vpack.c.b16 %v1609, %v1608
        %v1645 = vpack.c.b16 %v1611, %v1610
        %v1646 = vpack.c.b16 %v1613, %v1612
        %v1647 = vpack.c.b16 %v1615, %v1614
        %v1648 = vpack.c.b16 %v1617, %v1616
        %v1649 = vpack.c.b16 %v1619, %v1618
        %v1650 = vpack.c.b16 %v1621, %v1620
        %v1651 = vpack.c.b16 %v1623, %v1622
        %v1652 = vpack.c.b16 %v1625, %v1624
        %v1653 = vpack.c.b16 %v1627, %v1626
        %v1654 = vpack.c.b16 %v1629, %v1628
        %v1655 = vpack.c.b16 %v1631, %v1630
        %v1656 = vpack.c.b16 %v1633, %v1632
        %v1657 = vpack.c.b16 %v1635, %v1634
        %v1658 = vpack.c.b16 %v1637, %v1636
        %v1659 = vpack.c.b16 %v1639, %v1638
        %v1660 = vpack.c.b16 %v1641, %v1640
        %v1661 = vpack.c.b16 %v1643, %v1642
        %v1681 = vsel %vm1277, %v1085, 0
        %v1684 = vsel %vm1277, %v1086, 0
        %v1687 = vsel %vm1277, %v1087, 0
        %v1690 = vsel %vm1277, %v1088, 0
        %v1693 = vsel %vm1277, %v1089, 0
        %v1696 = vsel %vm1277, %v1090, 0
        %v1699 = vsel %vm1277, %v1091, 0
        %v1702 = vsel %vm1277, %v1092, 0
        %v1705 = vsel %vm1277, %v1093, 0
        %v1708 = vsel %vm1277, %v1094, 0
        %v1711 = vsel %vm1277, %v1095, 0
        %v1714 = vsel %vm1277, %v1096, 0
        %v1717 = vsel %vm1277, %v1097, 0
        %v1720 = vsel %vm1277, %v1098, 0
        %v1723 = vsel %vm1277, %v1171, 0
        %v1726 = vsel %vm1277, %v1276, 0
        %1728 = vmatpush.bf16.msra.mxu0 %v1651
        %1729 = vmatpush.bf16.msra.mxu0 %v1650
        %1730 = vmatpush.bf16.msra.mxu0 %v1649
        %1731 = vmatpush.bf16.msra.mxu0 %v1648
        %1732 = vmatpush.bf16.msra.mxu0 %v1647
        %1733 = vmatpush.bf16.msra.mxu0 %v1646
        %1734 = vmatpush.bf16.msra.mxu0 %v1645
        %1735 = vmatpush.bf16.msra.mxu0 %v1644
        %1736 = vmatmul.bf16.gmra.mxu0 %v1361
        %v1737 = vpop.f32.mrf.mxu0
        %v1738 = vadd.f32 0.0, %v1737
        %v1739 = vpop.f32.mrf.mxu0
        %v1740 = vadd.f32 0.0, %v1739
        %1741 = vmatmul.bf16.gmra.mxu0 %v1364
        %v1742 = vpop.f32.mrf.mxu0
        %v1743 = vadd.f32 0.0, %v1742
        %v1744 = vpop.f32.mrf.mxu0
        %v1745 = vadd.f32 0.0, %v1744
        %1746 = vmatmul.bf16.gmra.mxu0 %v1367
        %v1747 = vpop.f32.mrf.mxu0
        %v1748 = vadd.f32 0.0, %v1747
        %v1749 = vpop.f32.mrf.mxu0
        %v1750 = vadd.f32 0.0, %v1749
        %1751 = vmatmul.bf16.gmra.mxu0 %v1370
        %v1752 = vpop.f32.mrf.mxu0
        %v1753 = vadd.f32 0.0, %v1752
        %v1754 = vpop.f32.mrf.mxu0
        %v1755 = vadd.f32 0.0, %v1754
        %1756 = vmatmul.bf16.gmra.mxu0 %v1373
        %v1757 = vpop.f32.mrf.mxu0
        %v1758 = vadd.f32 0.0, %v1757
        %v1759 = vpop.f32.mrf.mxu0
        %v1760 = vadd.f32 0.0, %v1759
        %1761 = vmatmul.bf16.gmra.mxu0 %v1376
        %v1762 = vpop.f32.mrf.mxu0
        %v1763 = vadd.f32 0.0, %v1762
        %v1764 = vpop.f32.mrf.mxu0
        %v1765 = vadd.f32 0.0, %v1764
        %1766 = vmatmul.bf16.gmra.mxu0 %v1379
        %v1767 = vpop.f32.mrf.mxu0
        %v1768 = vadd.f32 0.0, %v1767
        %v1769 = vpop.f32.mrf.mxu0
        %v1770 = vadd.f32 0.0, %v1769
        %1771 = vmatmul.bf16.gmra.mxu0 %v1382
        %v1772 = vpop.f32.mrf.mxu0
        %v1773 = vadd.f32 0.0, %v1772
        %v1774 = vpop.f32.mrf.mxu0
        %v1775 = vadd.f32 0.0, %v1774
        %1776 = vmatmul.bf16.gmra.mxu0 %v1385
        %v1777 = vpop.f32.mrf.mxu0
        %v1778 = vadd.f32 0.0, %v1777
        %v1779 = vpop.f32.mrf.mxu0
        %v1780 = vadd.f32 0.0, %v1779
        %1781 = vmatmul.bf16.gmra.mxu0 %v1388
        %v1782 = vpop.f32.mrf.mxu0
        %v1783 = vadd.f32 0.0, %v1782
        %v1784 = vpop.f32.mrf.mxu0
        %v1785 = vadd.f32 0.0, %v1784
        %1786 = vmatmul.bf16.gmra.mxu0 %v1391
        %v1787 = vpop.f32.mrf.mxu0
        %v1788 = vadd.f32 0.0, %v1787
        %v1789 = vpop.f32.mrf.mxu0
        %v1790 = vadd.f32 0.0, %v1789
        %1791 = vmatmul.bf16.gmra.mxu0 %v1394
        %v1792 = vpop.f32.mrf.mxu0
        %v1793 = vadd.f32 0.0, %v1792
        %v1794 = vpop.f32.mrf.mxu0
        %v1795 = vadd.f32 0.0, %v1794
        %1796 = vmatmul.bf16.gmra.mxu0 %v1397
        %v1797 = vpop.f32.mrf.mxu0
        %v1798 = vadd.f32 0.0, %v1797
        %v1799 = vpop.f32.mrf.mxu0
        %v1800 = vadd.f32 0.0, %v1799
        %1801 = vmatmul.bf16.gmra.mxu0 %v1400
        %v1802 = vpop.f32.mrf.mxu0
        %v1803 = vadd.f32 0.0, %v1802
        %v1804 = vpop.f32.mrf.mxu0
        %v1805 = vadd.f32 0.0, %v1804
        %1806 = vmatmul.bf16.gmra.mxu0 %v1403
        %v1807 = vpop.f32.mrf.mxu0
        %v1808 = vadd.f32 0.0, %v1807
        %v1809 = vpop.f32.mrf.mxu0
        %v1810 = vadd.f32 0.0, %v1809
        %1811 = vmatmul.bf16.gmra.mxu0 %v1406
        %v1812 = vpop.f32.mrf.mxu0
        %v1813 = vadd.f32 0.0, %v1812
        %v1814 = vpop.f32.mrf.mxu0
        %v1815 = vadd.f32 0.0, %v1814
        %1816 = vdwg.mxu0
        %1817 = vmatpush.bf16.msra.mxu0 %v1659
        %1818 = vmatpush.bf16.msra.mxu0 %v1658
        %1819 = vmatpush.bf16.msra.mxu0 %v1657
        %1820 = vmatpush.bf16.msra.mxu0 %v1656
        %1821 = vmatpush.bf16.msra.mxu0 %v1655
        %1822 = vmatpush.bf16.msra.mxu0 %v1654
        %1823 = vmatpush.bf16.msra.mxu0 %v1653
        %1824 = vmatpush.bf16.msra.mxu0 %v1652
        %1825 = vmatmul.bf16.gmra.mxu0 %v1489
        %v1826 = vpop.f32.mrf.mxu0
        %v1827 = vadd.f32 %v1738, %v1826
        %v1828 = vpop.f32.mrf.mxu0
        %v1829 = vadd.f32 %v1740, %v1828
        %1830 = vmatmul.bf16.gmra.mxu0 %v1492
        %v1831 = vpop.f32.mrf.mxu0
        %v1832 = vadd.f32 %v1743, %v1831
        %v1833 = vpop.f32.mrf.mxu0
        %v1834 = vadd.f32 %v1745, %v1833
        %1835 = vmatmul.bf16.gmra.mxu0 %v1495
        %v1836 = vpop.f32.mrf.mxu0
        %v1837 = vadd.f32 %v1748, %v1836
        %v1838 = vpop.f32.mrf.mxu0
        %v1839 = vadd.f32 %v1750, %v1838
        %1840 = vmatmul.bf16.gmra.mxu0 %v1498
        %v1841 = vpop.f32.mrf.mxu0
        %v1842 = vadd.f32 %v1753, %v1841
        %v1843 = vpop.f32.mrf.mxu0
        %v1844 = vadd.f32 %v1755, %v1843
        %1845 = vmatmul.bf16.gmra.mxu0 %v1501
        %v1846 = vpop.f32.mrf.mxu0
        %v1847 = vadd.f32 %v1758, %v1846
        %v1848 = vpop.f32.mrf.mxu0
        %v1849 = vadd.f32 %v1760, %v1848
        %1850 = vmatmul.bf16.gmra.mxu0 %v1504
        %v1851 = vpop.f32.mrf.mxu0
        %v1852 = vadd.f32 %v1763, %v1851
        %v1853 = vpop.f32.mrf.mxu0
        %v1854 = vadd.f32 %v1765, %v1853
        %1855 = vmatmul.bf16.gmra.mxu0 %v1507
        %v1856 = vpop.f32.mrf.mxu0
        %v1857 = vadd.f32 %v1768, %v1856
        %v1858 = vpop.f32.mrf.mxu0
        %v1859 = vadd.f32 %v1770, %v1858
        %1860 = vmatmul.bf16.gmra.mxu0 %v1510
        %v1861 = vpop.f32.mrf.mxu0
        %v1862 = vadd.f32 %v1773, %v1861
        %v1863 = vpop.f32.mrf.mxu0
        %v1864 = vadd.f32 %v1775, %v1863
        %1865 = vmatmul.bf16.gmra.mxu0 %v1513
        %v1866 = vpop.f32.mrf.mxu0
        %v1867 = vadd.f32 %v1778, %v1866
        %v1868 = vpop.f32.mrf.mxu0
        %v1869 = vadd.f32 %v1780, %v1868
        %1870 = vmatmul.bf16.gmra.mxu0 %v1516
        %v1871 = vpop.f32.mrf.mxu0
        %v1872 = vadd.f32 %v1783, %v1871
        %v1873 = vpop.f32.mrf.mxu0
        %v1874 = vadd.f32 %v1785, %v1873
        %1875 = vmatmul.bf16.gmra.mxu0 %v1519
        %v1876 = vpop.f32.mrf.mxu0
        %v1877 = vadd.f32 %v1788, %v1876
        %v1878 = vpop.f32.mrf.mxu0
        %v1879 = vadd.f32 %v1790, %v1878
        %1880 = vmatmul.bf16.gmra.mxu0 %v1522
        %v1881 = vpop.f32.mrf.mxu0
        %v1882 = vadd.f32 %v1793, %v1881
        %v1883 = vpop.f32.mrf.mxu0
        %v1884 = vadd.f32 %v1795, %v1883
        %1885 = vmatmul.bf16.gmra.mxu0 %v1525
        %v1886 = vpop.f32.mrf.mxu0
        %v1887 = vadd.f32 %v1798, %v1886
        %v1888 = vpop.f32.mrf.mxu0
        %v1889 = vadd.f32 %v1800, %v1888
        %1890 = vmatmul.bf16.gmra.mxu0 %v1528
        %v1891 = vpop.f32.mrf.mxu0
        %v1892 = vadd.f32 %v1803, %v1891
        %v1893 = vpop.f32.mrf.mxu0
        %v1894 = vadd.f32 %v1805, %v1893
        %1895 = vmatmul.bf16.gmra.mxu0 %v1531
        %v1896 = vpop.f32.mrf.mxu0
        %v1897 = vadd.f32 %v1808, %v1896
        %v1898 = vpop.f32.mrf.mxu0
        %v1899 = vadd.f32 %v1810, %v1898
        %1900 = vmatmul.bf16.gmra.mxu0 %v1534
        %v1901 = vpop.f32.mrf.mxu0
        %v1902 = vadd.f32 %v1813, %v1901
        %v1903 = vpop.f32.mrf.mxu0
        %v1904 = vadd.f32 %v1815, %v1903
        %1905 = vdwg.mxu0
        %1906 = vmatpush.bf16.msra.mxu0 0
        %1907 = vmatpush.bf16.msra.mxu0 0
        %1908 = vmatpush.bf16.msra.mxu0 0
        %1909 = vmatpush.bf16.msra.mxu0 0
        %1910 = vmatpush.bf16.msra.mxu0 0
        %1911 = vmatpush.bf16.msra.mxu0 0
        %1912 = vmatpush.bf16.msra.mxu0 %v1661
        %1913 = vmatpush.bf16.msra.mxu0 %v1660
        %1914 = vmatmul.bf16.gmra.mxu0 %v1681
        %v1915 = vpop.f32.mrf.mxu0
        %v1916 = vadd.f32 %v1827, %v1915
        %v1917 = vpop.f32.mrf.mxu0
        %v1918 = vadd.f32 %v1829, %v1917
        %1919 = vmatmul.bf16.gmra.mxu0 %v1684
        %v1920 = vpop.f32.mrf.mxu0
        %v1921 = vadd.f32 %v1832, %v1920
        %v1922 = vpop.f32.mrf.mxu0
        %v1923 = vadd.f32 %v1834, %v1922
        %1924 = vmatmul.bf16.gmra.mxu0 %v1687
        %v1925 = vpop.f32.mrf.mxu0
        %v1926 = vadd.f32 %v1837, %v1925
        %v1927 = vpop.f32.mrf.mxu0
        %v1928 = vadd.f32 %v1839, %v1927
        %1929 = vmatmul.bf16.gmra.mxu0 %v1690
        %v1930 = vpop.f32.mrf.mxu0
        %v1931 = vadd.f32 %v1842, %v1930
        %v1932 = vpop.f32.mrf.mxu0
        %v1933 = vadd.f32 %v1844, %v1932
        %1934 = vmatmul.bf16.gmra.mxu0 %v1693
        %v1935 = vpop.f32.mrf.mxu0
        %v1936 = vadd.f32 %v1847, %v1935
        %v1937 = vpop.f32.mrf.mxu0
        %v1938 = vadd.f32 %v1849, %v1937
        %1939 = vmatmul.bf16.gmra.mxu0 %v1696
        %v1940 = vpop.f32.mrf.mxu0
        %v1941 = vadd.f32 %v1852, %v1940
        %v1942 = vpop.f32.mrf.mxu0
        %v1943 = vadd.f32 %v1854, %v1942
        %1944 = vmatmul.bf16.gmra.mxu0 %v1699
        %v1945 = vpop.f32.mrf.mxu0
        %v1946 = vadd.f32 %v1857, %v1945
        %v1947 = vpop.f32.mrf.mxu0
        %v1948 = vadd.f32 %v1859, %v1947
        %1949 = vmatmul.bf16.gmra.mxu0 %v1702
        %v1950 = vpop.f32.mrf.mxu0
        %v1951 = vadd.f32 %v1862, %v1950
        %v1952 = vpop.f32.mrf.mxu0
        %v1953 = vadd.f32 %v1864, %v1952
        %1954 = vmatmul.bf16.gmra.mxu0 %v1705
        %v1955 = vpop.f32.mrf.mxu0
        %v1956 = vadd.f32 %v1867, %v1955
        %v1957 = vpop.f32.mrf.mxu0
        %v1958 = vadd.f32 %v1869, %v1957
        %1959 = vmatmul.bf16.gmra.mxu0 %v1708
        %v1960 = vpop.f32.mrf.mxu0
        %v1961 = vadd.f32 %v1872, %v1960
        %v1962 = vpop.f32.mrf.mxu0
        %v1963 = vadd.f32 %v1874, %v1962
        %1964 = vmatmul.bf16.gmra.mxu0 %v1711
        %v1965 = vpop.f32.mrf.mxu0
        %v1966 = vadd.f32 %v1877, %v1965
        %v1967 = vpop.f32.mrf.mxu0
        %v1968 = vadd.f32 %v1879, %v1967
        %1969 = vmatmul.bf16.gmra.mxu0 %v1714
        %v1970 = vpop.f32.mrf.mxu0
        %v1971 = vadd.f32 %v1882, %v1970
        %v1972 = vpop.f32.mrf.mxu0
        %v1973 = vadd.f32 %v1884, %v1972
        %1974 = vmatmul.bf16.gmra.mxu0 %v1717
        %v1975 = vpop.f32.mrf.mxu0
        %v1976 = vadd.f32 %v1887, %v1975
        %v1977 = vpop.f32.mrf.mxu0
        %v1978 = vadd.f32 %v1889, %v1977
        %1979 = vmatmul.bf16.gmra.mxu0 %v1720
        %v1980 = vpop.f32.mrf.mxu0
        %v1981 = vadd.f32 %v1892, %v1980
        %v1982 = vpop.f32.mrf.mxu0
        %v1983 = vadd.f32 %v1894, %v1982
        %1984 = vmatmul.bf16.gmra.mxu0 %v1723
        %v1985 = vpop.f32.mrf.mxu0
        %v1986 = vadd.f32 %v1897, %v1985
        %v1987 = vpop.f32.mrf.mxu0
        %v1988 = vadd.f32 %v1899, %v1987
        %1989 = vmatmul.bf16.gmra.mxu0 %v1726
        %v1990 = vpop.f32.mrf.mxu0
        %v1991 = vadd.f32 %v1902, %v1990
        %v1992 = vpop.f32.mrf.mxu0
        %v1993 = vadd.f32 %v1904, %v1992
        %1994 = vdwg.mxu0
        %v1995 = vadd.f32 %v1916, %v1918
        %v1996 = vadd.f32 %v1995, %v1921
        %v1997 = vadd.f32 %v1996, %v1923
        %v1998 = vadd.f32 %v1997, %v1926
        %v1999 = vadd.f32 %v1998, %v1928
        %v2000 = vadd.f32 %v1999, %v1931
        %v2001 = vadd.f32 %v2000, %v1933
        %v2002 = vadd.f32 %v2001, %v1936
        %v2003 = vadd.f32 %v2002, %v1938
        %v2004 = vadd.f32 %v2003, %v1941
        %v2005 = vadd.f32 %v2004, %v1943
        %v2006 = vadd.f32 %v2005, %v1946
        %v2007 = vadd.f32 %v2006, %v1948
        %v2008 = vadd.f32 %v2007, %v1951
        %v2009 = vadd.f32 %v2008, %v1953
        %v2010 = vadd.f32 %v2009, %v1956
        %v2011 = vadd.f32 %v2010, %v1958
        %v2012 = vadd.f32 %v2011, %v1961
        %v2013 = vadd.f32 %v2012, %v1963
        %v2014 = vadd.f32 %v2013, %v1966
        %v2015 = vadd.f32 %v2014, %v1968
        %v2016 = vadd.f32 %v2015, %v1971
        %v2017 = vadd.f32 %v2016, %v1973
        %v2018 = vadd.f32 %v2017, %v1976
        %v2019 = vadd.f32 %v2018, %v1978
        %v2020 = vadd.f32 %v2019, %v1981
        %v2021 = vadd.f32 %v2020, %v1983
        %v2022 = vadd.f32 %v2021, %v1986
        %v2023 = vadd.f32 %v2022, %v1988
        %v2024 = vadd.f32 %v2023, %v1991
        %v2025 = vadd.f32 %v2024, %v1993
        %v2026 = vrot.slane %v2025, 4
        %v2027 = vadd.f32 %v2025, %v2026
        %v2028 = vrot.slane %v2027, 2
        %v2029 = vadd.f32 %v2027, %v2028
        %v2030 = vrot.slane %v2029, 1
        %v2031 = vadd.f32 %v2029, %v2030
        %v2032 = vmul.f32 %v1916, %v1916
        %v2033 = vmul.f32 %v1918, %v1918
        %v2034 = vmul.f32 %v1921, %v1921
        %v2035 = vmul.f32 %v1923, %v1923
        %v2036 = vmul.f32 %v1926, %v1926
        %v2037 = vmul.f32 %v1928, %v1928
        %v2038 = vmul.f32 %v1931, %v1931
        %v2039 = vmul.f32 %v1933, %v1933
        %v2040 = vmul.f32 %v1936, %v1936
        %v2041 = vmul.f32 %v1938, %v1938
        %v2042 = vmul.f32 %v1941, %v1941
        %v2043 = vmul.f32 %v1943, %v1943
        %v2044 = vmul.f32 %v1946, %v1946
        %v2045 = vmul.f32 %v1948, %v1948
        %v2046 = vmul.f32 %v1951, %v1951
        %v2047 = vmul.f32 %v1953, %v1953
        %v2048 = vmul.f32 %v1956, %v1956
        %v2049 = vmul.f32 %v1958, %v1958
        %v2050 = vmul.f32 %v1961, %v1961
        %v2051 = vmul.f32 %v1963, %v1963
        %v2052 = vmul.f32 %v1966, %v1966
        %v2053 = vmul.f32 %v1968, %v1968
        %v2054 = vmul.f32 %v1971, %v1971
        %v2055 = vmul.f32 %v1973, %v1973
        %v2056 = vmul.f32 %v1976, %v1976
        %v2057 = vmul.f32 %v1978, %v1978
        %v2058 = vmul.f32 %v1981, %v1981
        %v2059 = vmul.f32 %v1983, %v1983
        %v2060 = vmul.f32 %v1986, %v1986
        %v2061 = vmul.f32 %v1988, %v1988
        %v2062 = vmul.f32 %v1991, %v1991
        %v2063 = vmul.f32 %v1993, %v1993
        %v2064 = vadd.f32 %v2032, %v2033
        %v2065 = vadd.f32 %v2064, %v2034
        %v2066 = vadd.f32 %v2065, %v2035
        %v2067 = vadd.f32 %v2066, %v2036
        %v2068 = vadd.f32 %v2067, %v2037
        %v2069 = vadd.f32 %v2068, %v2038
        %v2070 = vadd.f32 %v2069, %v2039
        %v2071 = vadd.f32 %v2070, %v2040
        %v2072 = vadd.f32 %v2071, %v2041
        %v2073 = vadd.f32 %v2072, %v2042
        %v2074 = vadd.f32 %v2073, %v2043
        %v2075 = vadd.f32 %v2074, %v2044
        %v2076 = vadd.f32 %v2075, %v2045
        %v2077 = vadd.f32 %v2076, %v2046
        %v2078 = vadd.f32 %v2077, %v2047
        %v2079 = vadd.f32 %v2078, %v2048
        %v2080 = vadd.f32 %v2079, %v2049
        %v2081 = vadd.f32 %v2080, %v2050
        %v2082 = vadd.f32 %v2081, %v2051
        %v2083 = vadd.f32 %v2082, %v2052
        %v2084 = vadd.f32 %v2083, %v2053
        %v2085 = vadd.f32 %v2084, %v2054
        %v2086 = vadd.f32 %v2085, %v2055
        %v2087 = vadd.f32 %v2086, %v2056
        %v2088 = vadd.f32 %v2087, %v2057
        %v2089 = vadd.f32 %v2088, %v2058
        %v2090 = vadd.f32 %v2089, %v2059
        %v2091 = vadd.f32 %v2090, %v2060
        %v2092 = vadd.f32 %v2091, %v2061
        %v2093 = vadd.f32 %v2092, %v2062
        %v2094 = vadd.f32 %v2093, %v2063
        %v2095 = vrot.slane %v2094, 4
        %v2096 = vadd.f32 %v2094, %v2095
        %v2097 = vrot.slane %v2096, 2
        %v2098 = vadd.f32 %v2096, %v2097
        %v2099 = vrot.slane %v2098, 1
        %v2100 = vadd.f32 %v2098, %v2099
        %v2101 = vld [vmem:[%s4] sm:$0xff]
        %v2102 = vld [vmem:[%s4 + $0x8] sm:$0xff]
        %v2103 = vld [vmem:[%s4 + $0x10] sm:$0xff]
        %v2104 = vld [vmem:[%s4 + $0x18] sm:$0xff]
        %v2105 = vld [vmem:[%s4 + $0x20] sm:$0xff]
        %v2106 = vld [vmem:[%s4 + $0x28] sm:$0xff]
        %v2107 = vld [vmem:[%s4 + $0x30] sm:$0xff]
        %v2108 = vld [vmem:[%s4 + $0x38] sm:$0xff]
        %v2109 = vld [vmem:[%s4 + $0x40] sm:$0xff]
        %v2110 = vld [vmem:[%s4 + $0x48] sm:$0xff]
        %v2111 = vld [vmem:[%s4 + $0x50] sm:$0xff]
        %v2112 = vld [vmem:[%s4 + $0x58] sm:$0xff]
        %v2113 = vld [vmem:[%s4 + $0x60] sm:$0xff]
        %v2114 = vld [vmem:[%s4 + $0x68] sm:$0xff]
        %v2115 = vld [vmem:[%s4 + $0x70] sm:$0xff]
        %v2116 = vld [vmem:[%s4 + $0x78] sm:$0xff]
        %2117 = vmatpush.msra.mxu0 %v2116
        %2118 = vmatpush.msra.mxu0 %v2115
        %2119 = vmatpush.msra.mxu0 %v2114
        %2120 = vmatpush.msra.mxu0 %v2113
        %2121 = vmatpush.msra.mxu0 %v2112
        %2122 = vmatpush.msra.mxu0 %v2111
        %2123 = vmatpush.msra.mxu0 %v2110
        %2124 = vmatpush.msra.mxu0 %v2109
        %2125 = vmatpush.msra.mxu0 %v2108
        %2126 = vmatpush.msra.mxu0 %v2107
        %2127 = vmatpush.msra.mxu0 %v2106
        %2128 = vmatpush.msra.mxu0 %v2105
        %2129 = vmatpush.msra.mxu0 %v2104
        %2130 = vmatpush.msra.mxu0 %v2103
        %2131 = vmatpush.msra.mxu0 %v2102
        %2132 = vmatpush.msra.mxu0 %v2101
        %2133 = vmatmul.f32.gmra.mxu0 %v2031
        %v2134 = vpop.f32.mrf.mxu0
        %v2135 = vadd.f32 0.0, %v2134
        %2136 = vdwg.mxu0
        %2137 = vmatpush.msra.mxu0 %v2116
        %2138 = vmatpush.msra.mxu0 %v2115
        %2139 = vmatpush.msra.mxu0 %v2114
        %2140 = vmatpush.msra.mxu0 %v2113
        %2141 = vmatpush.msra.mxu0 %v2112
        %2142 = vmatpush.msra.mxu0 %v2111
        %2143 = vmatpush.msra.mxu0 %v2110
        %2144 = vmatpush.msra.mxu0 %v2109
        %2145 = vmatpush.msra.mxu0 %v2108
        %2146 = vmatpush.msra.mxu0 %v2107
        %2147 = vmatpush.msra.mxu0 %v2106
        %2148 = vmatpush.msra.mxu0 %v2105
        %2149 = vmatpush.msra.mxu0 %v2104
        %2150 = vmatpush.msra.mxu0 %v2103
        %2151 = vmatpush.msra.mxu0 %v2102
        %2152 = vmatpush.msra.mxu0 %v2101
        %2153 = vmatmul.f32.gmra.mxu0 %v2100
        %v2154 = vpop.f32.mrf.mxu0
        %v2155 = vadd.f32 0.0, %v2154
        %2156 = vdwg.mxu0
        %v2157 = vmul.f32 %v2135, 0.0009765625
        %v2158 = vmul.f32 %v2155, 0.0009765625
        %v2159 = vmul.f32 %v2157, %v2157
        %v2160 = vsub.f32 %v2158, %v2159
        %v2161 = vmax.f32 %v2160, 0.0
        %v2162 = vadd.f32 %v2161, 1e-05
        %v2163 = vrsqrt.pop %v2162
        %v2164 = vmul.f32 %v2163, %v2162
        %v2165 = vmul.f32 %v2164, %v2163
        %v2166 = vmul.f32 0.5, %v2165
        %v2167 = vsub.f32 1.5, %v2166
        %v2168 = vmul.f32 %v2163, %v2167
        %vm2169 = vweird.f32 %v2162
        %vm2170 = vweird.f32 %v2163
        %vm2171 = vmor %vm2169, %vm2170
        %v2172 = vsel %vm2171, %v2163, %v2168
        %v2173 = vld [vmem:[%s5] sm:$0xff]
        %v2174 = vld [vmem:[%s5 + $0x8] sm:$0xff]
        %v2175 = vld [vmem:[%s5 + $0x10] sm:$0xff]
        %v2176 = vld [vmem:[%s5 + $0x18] sm:$0xff]
        %v2178 = vsel %vm1277, %v2157, 0
        %2180 = vmatpush.msra.mxu0 0.0
        %2181 = vmatpush.msra.mxu0 0.0
        %2182 = vmatpush.msra.mxu0 0.0
        %2183 = vmatpush.msra.mxu0 0.0
        %2184 = vmatpush.msra.mxu0 0.0
        %2185 = vmatpush.msra.mxu0 0.0
        %2186 = vmatpush.msra.mxu0 0.0
        %2187 = vmatpush.msra.mxu0 0.0
        %2188 = vmatpush.msra.mxu0 0.0
        %2189 = vmatpush.msra.mxu0 0.0
        %2190 = vmatpush.msra.mxu0 0.0
        %2191 = vmatpush.msra.mxu0 0.0
        %2192 = vmatpush.msra.mxu0 %v2176
        %2193 = vmatpush.msra.mxu0 %v2175
        %2194 = vmatpush.msra.mxu0 %v2174
        %2195 = vmatpush.msra.mxu0 %v2173
        %2196 = vmatmul.f32.gmra.mxu0 %v2178
        %v2197 = vpop.f32.mrf.mxu0
        %v2198 = vadd.f32 0.0, %v2197
        %2199 = vdwg.mxu0
        %v2201 = vsel %vm1277, %v2172, 0
        %2203 = vmatpush.msra.mxu0 0.0
        %2204 = vmatpush.msra.mxu0 0.0
        %2205 = vmatpush.msra.mxu0 0.0
        %2206 = vmatpush.msra.mxu0 0.0
        %2207 = vmatpush.msra.mxu0 0.0
        %2208 = vmatpush.msra.mxu0 0.0
        %2209 = vmatpush.msra.mxu0 0.0
        %2210 = vmatpush.msra.mxu0 0.0
        %2211 = vmatpush.msra.mxu0 0.0
        %2212 = vmatpush.msra.mxu0 0.0
        %2213 = vmatpush.msra.mxu0 0.0
        %2214 = vmatpush.msra.mxu0 0.0
        %2215 = vmatpush.msra.mxu0 %v2176
        %2216 = vmatpush.msra.mxu0 %v2175
        %2217 = vmatpush.msra.mxu0 %v2174
        %2218 = vmatpush.msra.mxu0 %v2173
        %2219 = vmatmul.f32.gmra.mxu0 %v2201
        %v2220 = vpop.f32.mrf.mxu0
        %v2221 = vadd.f32 0.0, %v2220
        %2222 = vdwg.mxu0
        %v2223 = vld [vmem:[%s2] sm:$0x1]
        %v2224 = vmul.f32 %v2221, %v2223
        %v2225 = vld [vmem:[%s3] sm:$0x1]
        %v2226 = vmul.f32 %v2198, %v2224
        %v2227 = vsub.f32 %v2225, %v2226
        %v2228 = vperm.slane %v2224, 0
        %v2229 = vmul.f32 %v1916, %v2228
        %v2230 = vmul.f32 %v1918, %v2228
        %v2231 = vmul.f32 %v1921, %v2228
        %v2232 = vmul.f32 %v1923, %v2228
        %v2233 = vmul.f32 %v1926, %v2228
        %v2234 = vmul.f32 %v1928, %v2228
        %v2235 = vmul.f32 %v1931, %v2228
        %v2236 = vmul.f32 %v1933, %v2228
        %v2237 = vmul.f32 %v1936, %v2228
        %v2238 = vmul.f32 %v1938, %v2228
        %v2239 = vmul.f32 %v1941, %v2228
        %v2240 = vmul.f32 %v1943, %v2228
        %v2241 = vmul.f32 %v1946, %v2228
        %v2242 = vmul.f32 %v1948, %v2228
        %v2243 = vmul.f32 %v1951, %v2228
        %v2244 = vmul.f32 %v1953, %v2228
        %v2245 = vmul.f32 %v1956, %v2228
        %v2246 = vmul.f32 %v1958, %v2228
        %v2247 = vmul.f32 %v1961, %v2228
        %v2248 = vmul.f32 %v1963, %v2228
        %v2249 = vmul.f32 %v1966, %v2228
        %v2250 = vmul.f32 %v1968, %v2228
        %v2251 = vmul.f32 %v1971, %v2228
        %v2252 = vmul.f32 %v1973, %v2228
        %v2253 = vmul.f32 %v1976, %v2228
        %v2254 = vmul.f32 %v1978, %v2228
        %v2255 = vmul.f32 %v1981, %v2228
        %v2256 = vmul.f32 %v1983, %v2228
        %v2257 = vmul.f32 %v1986, %v2228
        %v2258 = vmul.f32 %v1988, %v2228
        %v2259 = vmul.f32 %v1991, %v2228
        %v2260 = vmul.f32 %v1993, %v2228
        %v2262 = vperm.slane %v2227, 0
        %v2264 = vadd.f32 %v2229, %v2262
        %v2265 = vadd.f32 %v2230, %v2262
        %v2266 = vadd.f32 %v2231, %v2262
        %v2267 = vadd.f32 %v2232, %v2262
        %v2268 = vadd.f32 %v2233, %v2262
        %v2269 = vadd.f32 %v2234, %v2262
        %v2270 = vadd.f32 %v2235, %v2262
        %v2271 = vadd.f32 %v2236, %v2262
        %v2272 = vadd.f32 %v2237, %v2262
        %v2273 = vadd.f32 %v2238, %v2262
        %v2274 = vadd.f32 %v2239, %v2262
        %v2275 = vadd.f32 %v2240, %v2262
        %v2276 = vadd.f32 %v2241, %v2262
        %v2277 = vadd.f32 %v2242, %v2262
        %v2278 = vadd.f32 %v2243, %v2262
        %v2279 = vadd.f32 %v2244, %v2262
        %v2280 = vadd.f32 %v2245, %v2262
        %v2281 = vadd.f32 %v2246, %v2262
        %v2282 = vadd.f32 %v2247, %v2262
        %v2283 = vadd.f32 %v2248, %v2262
        %v2284 = vadd.f32 %v2249, %v2262
        %v2285 = vadd.f32 %v2250, %v2262
        %v2286 = vadd.f32 %v2251, %v2262
        %v2287 = vadd.f32 %v2252, %v2262
        %v2288 = vadd.f32 %v2253, %v2262
        %v2289 = vadd.f32 %v2254, %v2262
        %v2290 = vadd.f32 %v2255, %v2262
        %v2291 = vadd.f32 %v2256, %v2262
        %v2292 = vadd.f32 %v2257, %v2262
        %v2293 = vadd.f32 %v2258, %v2262
        %v2294 = vadd.f32 %v2259, %v2262
        %v2295 = vadd.f32 %v2260, %v2262
        %v2296 = vmax.f32 %v2264, 0.0
        %v2297 = vmax.f32 %v2265, 0.0
        %v2298 = vmax.f32 %v2266, 0.0
        %v2299 = vmax.f32 %v2267, 0.0
        %v2300 = vmax.f32 %v2268, 0.0
        %v2301 = vmax.f32 %v2269, 0.0
        %v2302 = vmax.f32 %v2270, 0.0
        %v2303 = vmax.f32 %v2271, 0.0
        %v2304 = vmax.f32 %v2272, 0.0
        %v2305 = vmax.f32 %v2273, 0.0
        %v2306 = vmax.f32 %v2274, 0.0
        %v2307 = vmax.f32 %v2275, 0.0
        %v2308 = vmax.f32 %v2276, 0.0
        %v2309 = vmax.f32 %v2277, 0.0
        %v2310 = vmax.f32 %v2278, 0.0
        %v2311 = vmax.f32 %v2279, 0.0
        %v2312 = vmax.f32 %v2280, 0.0
        %v2313 = vmax.f32 %v2281, 0.0
        %v2314 = vmax.f32 %v2282, 0.0
        %v2315 = vmax.f32 %v2283, 0.0
        %v2316 = vmax.f32 %v2284, 0.0
        %v2317 = vmax.f32 %v2285, 0.0
        %v2318 = vmax.f32 %v2286, 0.0
        %v2319 = vmax.f32 %v2287, 0.0
        %v2320 = vmax.f32 %v2288, 0.0
        %v2321 = vmax.f32 %v2289, 0.0
        %v2322 = vmax.f32 %v2290, 0.0
        %v2323 = vmax.f32 %v2291, 0.0
        %v2324 = vmax.f32 %v2292, 0.0
        %v2325 = vmax.f32 %v2293, 0.0
        %v2326 = vmax.f32 %v2294, 0.0
        %v2327 = vmax.f32 %v2295, 0.0
        %2328 = vst [vmem:[%s244] sm:$0xff] %v2296
        %2329 = vst [vmem:[%s244 + $0x8] sm:$0xff] %v2297
        %2330 = vst [vmem:[%s244 + $0x10] sm:$0xff] %v2298
        %2331 = vst [vmem:[%s244 + $0x18] sm:$0xff] %v2299
        %2332 = vst [vmem:[%s244 + $0x20] sm:$0xff] %v2300
        %2333 = vst [vmem:[%s244 + $0x28] sm:$0xff] %v2301
        %2334 = vst [vmem:[%s244 + $0x30] sm:$0xff] %v2302
        %2335 = vst [vmem:[%s244 + $0x38] sm:$0xff] %v2303
        %2336 = vst [vmem:[%s244 + $0x40] sm:$0xff] %v2304
        %2337 = vst [vmem:[%s244 + $0x48] sm:$0xff] %v2305
        %2338 = vst [vmem:[%s244 + $0x50] sm:$0xff] %v2306
        %2339 = vst [vmem:[%s244 + $0x58] sm:$0xff] %v2307
        %2340 = vst [vmem:[%s244 + $0x60] sm:$0xff] %v2308
        %2341 = vst [vmem:[%s244 + $0x68] sm:$0xff] %v2309
        %2342 = vst [vmem:[%s244 + $0x70] sm:$0xff] %v2310
        %2343 = vst [vmem:[%s244 + $0x78] sm:$0xff] %v2311
        %2344 = vst [vmem:[%s244 + $0x80] sm:$0xff] %v2312
        %2345 = vst [vmem:[%s244 + $0x88] sm:$0xff] %v2313
        %2346 = vst [vmem:[%s244 + $0x90] sm:$0xff] %v2314
        %2347 = vst [vmem:[%s244 + $0x98] sm:$0xff] %v2315
        %2348 = vst [vmem:[%s244 + $0xa0] sm:$0xff] %v2316
        %2349 = vst [vmem:[%s244 + $0xa8] sm:$0xff] %v2317
        %2350 = vst [vmem:[%s244 + $0xb0] sm:$0xff] %v2318
        %2351 = vst [vmem:[%s244 + $0xb8] sm:$0xff] %v2319
        %2352 = vst [vmem:[%s244 + $0xc0] sm:$0xff] %v2320
        %2353 = vst [vmem:[%s244 + $0xc8] sm:$0xff] %v2321
        %2354 = vst [vmem:[%s244 + $0xd0] sm:$0xff] %v2322
        %2355 = vst [vmem:[%s244 + $0xd8] sm:$0xff] %v2323
        %2356 = vst [vmem:[%s244 + $0xe0] sm:$0xff] %v2324
        %2357 = vst [vmem:[%s244 + $0xe8] sm:$0xff] %v2325
        %2358 = vst [vmem:[%s244 + $0xf0] sm:$0xff] %v2326
        %2359 = vst [vmem:[%s244 + $0xf8] sm:$0xff] %v2327
        %s2360 = sand.u32 %s159, 1
        %s2361 = scalar_lea.sflag [#allocation3], %s2360
        %s2362 = sand.u32 %s159, 1
        %s2363 = smul.addr %s2362, 256
        %s2364 = scalar_lea.vmem [#allocation2], %s2363
        // Predicated region
        $region45: #{tpu_custom_call.1} parent=43 // pred_check
          %p2365 = pneg %p169
        $region46: #{tpu_custom_call.1} parent=43 // pred_check_branch
          %2367 = sbr.rel (%p2365) target = $region48
        $region47: #{tpu_custom_call.1} parent=43 // pred_region
          %2369 = vsyncadd %s2361, 0
          %s2370 = smul.addr %s20, 32
          %s2371 = smul.addr %s2370, 8
          %s2372 = scalar_lea.hbm %s6, %s2371
          %s2373 = sshll.u32 %s2364, 4
          %s2374 = int_to_ptr.vmem [resolvable:$true] %s2373
          %s2375 = sshll.u32 %s2372, 4
          %s2376 = int_to_ptr.hbm [resolvable:$true] %s2375
          %2381 = dma.vmem_to_hbm [thread:$0]  %s2374, 4096, %s2376, %s2361, 128, 128, 8
        $region48: #{tpu_custom_call.1} parent=43 // pred_fallthru
          _
      $region44: #{tpu_custom_call.1} parent=5 // pred_fallthru
        _
      %p2382 = scmp.le.s32.totalorder 2, %s15
      // Predicated region
      $region49: #{tpu_custom_call.1} parent=5 // pred_check
        %p2383 = pneg %p2382
      $region50: #{tpu_custom_call.1} parent=5 // pred_check_branch
        %2385 = sbr.rel (%p2383) target = $region52
      $region51: #{tpu_custom_call.1} parent=5 // pred_region
        %s2386 = ssub.s32 %s15, 2
        // Predicated region
        $region53: #{tpu_custom_call.1} parent=51 // pred_check
          %p2387 = pneg %p175
        $region54: #{tpu_custom_call.1} parent=51 // pred_check_branch
          %2389 = sbr.rel (%p2387) target = $region56
        $region55: #{tpu_custom_call.1} parent=51 // pred_region
          %s2390 = sand.u32 %s160, 1
          %s2391 = scalar_lea.sflag [#allocation3], %s2390
          %s2392 = sand.u32 %s160, 1
          %s2393 = smul.addr %s2392, 256
          %s2394 = scalar_lea.vmem [#allocation2], %s2393
          %2396 = dma.done %s2391, 4096
        $region56: #{tpu_custom_call.1} parent=51 // pred_fallthru
          _
      $region52: #{tpu_custom_call.1} parent=5 // pred_fallthru
        _
    $region6: #{tpu_custom_call.1} parent=1 // loop_footer
      %s19 = sadd.s32 1, %s15
    $region7: #{tpu_custom_call.1} parent=1 // loop_footer_branch
      %14 = sbr.rel target = $region3
    $region8: #{tpu_custom_call.1} parent=1 // loop_exit
      _
    %2397 = vsyncpa [#allocation3], 1
    %s2398 = scalar_lea.sflag [#allocation3], 1
    %2399 = vsyncpa %s2398, 1

</llo_original>
